<compile_context>
chip_gen: v7x
topology: tpu7x:2x2x1
jax: 0.10.0
libtpu: 0.0.40
codegen_flags: <defaults>
</compile_context>

<pallas_src>
import math
from functools import partial

import jax
import jax.numpy as jnp
from jax import lax
from jax.experimental import pallas as pl
from jax.experimental.pallas import tpu as pltpu


def _attention_block_kernel(x_ref, gamma_ref, beta_ref, red_ref, bcast_ref,
                            wqkv_ref, bqkv_ref, wproj_ref, bproj_ref,
                            out_ref, a_scratch, *, num_heads, num_groups, eps):
    # x_ref block: (1, C, T) -- channels on sublanes, tokens on lanes.
    x = x_ref[0].astype(jnp.float32)                         # (C, T)
    C, T = x.shape
    d = C // num_heads
    inv_n = 1.0 / float(T * (C // num_groups))

    # ---------------- GroupNorm(num_groups, C), f32 math ----------------
    # Two-pass: mean first, then group-mean of (x - mean)^2 (no cancellation).
    chan_sum = jnp.sum(x, axis=1, keepdims=True)             # (C, 1)
    grp_sum = jnp.dot(red_ref[...], chan_sum,
                      preferred_element_type=jnp.float32)    # (G, 1)
    mean = jnp.dot(bcast_ref[...], grp_sum,
                   preferred_element_type=jnp.float32) * inv_n   # (C, 1)
    xc = x - mean
    chan_sq = jnp.sum(xc * xc, axis=1, keepdims=True)        # (C, 1)
    grp_sq = jnp.dot(red_ref[...], chan_sq,
                     preferred_element_type=jnp.float32)     # (G, 1)
    var = jnp.dot(bcast_ref[...], grp_sq,
                  preferred_element_type=jnp.float32) * inv_n    # (C, 1)
    xn = xc * lax.rsqrt(var + eps) * gamma_ref[...] + beta_ref[...]   # (C, T)

    # ---------------- qkv projection (Conv1d k=1): bf16 MXU, f32 accumulate ----
    # W_qkv is bf16 with the attention scale pre-folded into its q rows/bias.
    qkv = jnp.dot(wqkv_ref[...], xn.astype(jnp.bfloat16),
                  preferred_element_type=jnp.float32) + bqkv_ref[...]   # (3C, T)

    # ---------------- multi-head attention ("new order" q|k|v chunking) -------
    for h in range(num_heads):                               # static, small head count
        # sublane slices at multiples of 8; tiny f32 transpose puts q token-major
        # so both matmuls below run in the MXU's canonical orientation.
        q_ht = qkv[h * d:(h + 1) * d, :].T.astype(jnp.bfloat16)              # (T, d)
        k_h = qkv[C + h * d:C + (h + 1) * d, :].astype(jnp.bfloat16)         # (d, T)
        v_h = qkv[2 * C + h * d:2 * C + (h + 1) * d, :].astype(jnp.bfloat16) # (d, T)
        # w[t, s] = sum_c q[c, t] * k[c, s]     ('bct,bcs->bts'), scale pre-folded
        w = jnp.dot(q_ht, k_h, preferred_element_type=jnp.float32)           # (T, T)
        w = jnp.exp(w - jnp.max(w, axis=-1, keepdims=True))
        w = w * pl.reciprocal(jnp.sum(w, axis=-1, keepdims=True), approx=True)
        # a[c, t] = sum_s w[t, s] * v[c, s]     ('bts,bcs->bct'): QuantSMVMatMul
        a_h = lax.dot_general(v_h, w.astype(jnp.bfloat16),
                              (((1,), (1,)), ((), ())),
                              preferred_element_type=jnp.float32)            # (d, T)
        # Write into scratch: ends this head's live ranges (no list+concat).
        a_scratch[h * d:(h + 1) * d, :] = a_h

    # ---------------- proj_out + residual ----------------
    h_out = jnp.dot(wproj_ref[...], a_scratch[...].astype(jnp.bfloat16),
                    preferred_element_type=jnp.float32) + bproj_ref[...]     # (C, T)
    out_ref[0] = (x + h_out).astype(out_ref.dtype)


def quant_attention_block(x, params, *, num_heads, num_groups=32, eps=1e-5):
    """x: (B, C, H, W) NCHW, float32. Returns (B, C, H, W)."""
    B, C, H, W = x.shape
    T = H * W
    d = C // num_heads
    x_ct = x.reshape(B, C, T)                                 # free reshape, no transpose

    # Fold the attention scale (d**-0.25 applied to both q and k == d**-0.5 on q)
    # into the q rows of W_qkv and b_qkv on the host; cast weights to bf16 once.
    qk_scale = 1.0 / math.sqrt(d)
    scale_rows = jnp.concatenate([jnp.full((C,), qk_scale, jnp.float32),
                                  jnp.ones((2 * C,), jnp.float32)])
    w_qkv_s = (params["w_qkv"] * scale_rows[:, None]).astype(jnp.bfloat16)   # (3C, C)
    b_qkv_s = (params["b_qkv"] * scale_rows).reshape(3 * C, 1).astype(jnp.float32)
    w_proj = params["w_proj"].astype(jnp.bfloat16)            # (C, C)
    b_proj = params["b_proj"].reshape(C, 1).astype(jnp.float32)
    gamma = params["gamma"].reshape(C, 1).astype(jnp.float32)
    beta = params["beta"].reshape(C, 1).astype(jnp.float32)

    # Small group-norm reducer (G, C) and broadcaster (C, G) instead of a (C, C) mask.
    gidx = jnp.arange(C) // (C // num_groups)
    red = (jnp.arange(num_groups)[:, None] == gidx[None, :]).astype(jnp.float32)  # (G, C)
    bcast = red.T                                                                  # (C, G)

    kernel = partial(_attention_block_kernel, num_heads=num_heads,
                     num_groups=num_groups, eps=eps)

    out_ct = pl.pallas_call(
        kernel,
        out_shape=jax.ShapeDtypeStruct((B, C, T), x.dtype),
        grid_spec=pltpu.PrefetchScalarGridSpec(
            num_scalar_prefetch=0,
            grid=(B,),
            in_specs=[
                pl.BlockSpec((1, C, T), lambda b: (b, 0, 0)),          # x (channels-major)
                pl.BlockSpec((C, 1), lambda b: (0, 0)),                # gamma
                pl.BlockSpec((C, 1), lambda b: (0, 0)),                # beta
                pl.BlockSpec((num_groups, C), lambda b: (0, 0)),       # group reducer
                pl.BlockSpec((C, num_groups), lambda b: (0, 0)),       # group broadcaster
                pl.BlockSpec((3 * C, C), lambda b: (0, 0)),            # W_qkv (bf16, scaled)
                pl.BlockSpec((3 * C, 1), lambda b: (0, 0)),            # b_qkv (scaled)
                pl.BlockSpec((C, C), lambda b: (0, 0)),                # W_proj (bf16)
                pl.BlockSpec((C, 1), lambda b: (0, 0)),                # b_proj
            ],
            out_specs=pl.BlockSpec((1, C, T), lambda b: (b, 0, 0)),
            scratch_shapes=[pltpu.VMEM((C, T), jnp.float32)],          # per-head accumulator
        ),
        compiler_params=pltpu.CompilerParams(
            dimension_semantics=("parallel",),
            vmem_limit_bytes=32 * 1024 * 1024),
    )(x_ct, gamma, beta, red, bcast, w_qkv_s, b_qkv_s, w_proj, b_proj)

    return out_ct.reshape(B, C, H, W)


def reference(x, params, *, num_heads, num_groups=32, eps=1e-5):
    """Pure-JAX f32 reference matching the PyTorch forward (quant disabled)."""
    B, C, H, W = x.shape
    T = H * W
    xr = x.reshape(B, C, T)
    xg = xr.reshape(B, num_groups, C // num_groups, T)
    mean = xg.mean(axis=(2, 3), keepdims=True)
    var = xg.var(axis=(2, 3), keepdims=True)
    xn = ((xg - mean) / jnp.sqrt(var + eps)).reshape(B, C, T)
    xn = xn * params["gamma"][None, :, None] + params["beta"][None, :, None]
    qkv = jnp.einsum("oc,bct->bot", params["w_qkv"], xn) + params["b_qkv"][None, :, None]
    d = C // num_heads
    scale = 1.0 / math.sqrt(math.sqrt(d))
    q, k, v = jnp.split(qkv, 3, axis=1)
    q = q.reshape(B * num_heads, d, T)
    k = k.reshape(B * num_heads, d, T)
    v = v.reshape(B * num_heads, d, T)
    w = jnp.einsum("bct,bcs->bts", q * scale, k * scale)
    w = jax.nn.softmax(w, axis=-1)
    a = jnp.einsum("bts,bcs->bct", w, v).reshape(B, C, T)
    h = jnp.einsum("oc,bct->bot", params["w_proj"], a) + params["b_proj"][None, :, None]
    return (xr + h).reshape(B, C, H, W)


if __name__ == "__main__":
    B, C, H, W = 2, 64, 8, 8
    num_heads = 4
    num_groups = 32   # GroupNorm32, as in guided-diffusion `normalization(channels)`

    key = jax.random.PRNGKey(0)
    kx, k1, k2, k3, k4, k5, k6 = jax.random.split(key, 7)
    x = jax.random.normal(kx, (B, C, H, W), jnp.float32)

    params = {
        "gamma": 1.0 + 0.1 * jax.random.normal(k1, (C,), jnp.float32),
        "beta": 0.1 * jax.random.normal(k2, (C,), jnp.float32),
        "w_qkv": jax.random.normal(k3, (3 * C, C), jnp.float32) / math.sqrt(C),
        "b_qkv": 0.01 * jax.random.normal(k4, (3 * C,), jnp.float32),
        # zero_module(proj_out) in the original -> zeros; non-zero here to exercise compute
        "w_proj": jax.random.normal(k5, (C, C), jnp.float32) / math.sqrt(C),
        "b_proj": 0.01 * jax.random.normal(k6, (C,), jnp.float32),
    }

    out = quant_attention_block(x, params, num_heads=num_heads, num_groups=num_groups)
    out = jax.block_until_ready(out)

    ref = reference(x, params, num_heads=num_heads, num_groups=num_groups)
    assert out.shape == (B, C, H, W)
    # bf16 MXU operands + EUP approx reciprocal vs. a pure-f32 reference -> looser
    # tolerance; structural bugs (wrong scale / head order / norm) would still be O(1).
    assert jnp.allclose(out, ref, atol=1e-1, rtol=5e-2), float(jnp.max(jnp.abs(out - ref)))

    print("KERNEL_OK")
</pallas_src>

<mosaic_0001>
module attributes {stable_mosaic.version = 11 : i64} {
  func.func @_attention_block_kernel(%arg0: i32, %arg1: memref<1x64x64xf32, #tpu.memory_space<vmem>>, %arg2: memref<64x1xf32, #tpu.memory_space<vmem>>, %arg3: memref<64x1xf32, #tpu.memory_space<vmem>>, %arg4: memref<32x64xf32, #tpu.memory_space<vmem>>, %arg5: memref<64x32xf32, #tpu.memory_space<vmem>>, %arg6: memref<192x64xbf16, #tpu.memory_space<vmem>>, %arg7: memref<192x1xf32, #tpu.memory_space<vmem>>, %arg8: memref<64x64xbf16, #tpu.memory_space<vmem>>, %arg9: memref<64x1xf32, #tpu.memory_space<vmem>>, %arg10: memref<1x64x64xf32, #tpu.memory_space<vmem>>, %arg11: memref<64x64xf32, #tpu.memory_space<vmem>>) attributes {dimension_semantics = [#tpu.dimension_semantics<parallel>], iteration_bounds = array<i64: 2>, scalar_prefetch = 0 : i64, scratch_operands = 1 : i64, tpu.core_type = #tpu.core_type<tc>, window_params = [{transform_indices = @transform_0, window_bounds = array<i64: 1, 64, 64>}, {pipeline_mode = #tpu.pipeline_mode<synchronous>, transform_indices = @transform_1, window_bounds = array<i64: 64, 1>}, {pipeline_mode = #tpu.pipeline_mode<synchronous>, transform_indices = @transform_2, window_bounds = array<i64: 64, 1>}, {pipeline_mode = #tpu.pipeline_mode<synchronous>, transform_indices = @transform_3, window_bounds = array<i64: 32, 64>}, {pipeline_mode = #tpu.pipeline_mode<synchronous>, transform_indices = @transform_4, window_bounds = array<i64: 64, 32>}, {pipeline_mode = #tpu.pipeline_mode<synchronous>, transform_indices = @transform_5, window_bounds = array<i64: 192, 64>}, {pipeline_mode = #tpu.pipeline_mode<synchronous>, transform_indices = @transform_6, window_bounds = array<i64: 192, 1>}, {pipeline_mode = #tpu.pipeline_mode<synchronous>, transform_indices = @transform_7, window_bounds = array<i64: 64, 64>}, {pipeline_mode = #tpu.pipeline_mode<synchronous>, transform_indices = @transform_8, window_bounds = array<i64: 64, 1>}, {transform_indices = @transform_9, window_bounds = array<i64: 1, 64, 64>}]} {
    %c0 = arith.constant 0 : index
    %c0_0 = arith.constant 0 : index
    %c0_1 = arith.constant 0 : index
    %0 = vector.load %arg1[%c0, %c0_0, %c0_1] : memref<1x64x64xf32, #tpu.memory_space<vmem>>, vector<1x64x64xf32>
    %1 = vector.shape_cast %0 : vector<1x64x64xf32> to vector<64x64xf32>
    %cst = arith.constant dense<0.000000e+00> : vector<64xf32>
    %2 = vector.multi_reduction <add>, %1, %cst [1] : vector<64x64xf32> to vector<64xf32>
    %3 = vector.shape_cast %2 : vector<64xf32> to vector<64x1xf32>
    %c0_2 = arith.constant 0 : index
    %c0_3 = arith.constant 0 : index
    %4 = vector.load %arg4[%c0_2, %c0_3] : memref<32x64xf32, #tpu.memory_space<vmem>>, vector<32x64xf32>
    %cst_4 = arith.constant dense<0.000000e+00> : vector<32x1xf32>
    %5 = tpu.matmul %4, %3, %cst_4 {dimension_numbers = #tpu.dot_dimension_numbers<[1], [0], [0], [1], [0, 0, 1, 1], [], []>} : vector<32x64xf32>, vector<64x1xf32>, vector<32x1xf32> -> vector<32x1xf32>
    %c0_5 = arith.constant 0 : index
    %c0_6 = arith.constant 0 : index
    %6 = vector.load %arg5[%c0_5, %c0_6] : memref<64x32xf32, #tpu.memory_space<vmem>>, vector<64x32xf32>
    %cst_7 = arith.constant dense<0.000000e+00> : vector<64x1xf32>
    %7 = tpu.matmul %6, %5, %cst_7 {dimension_numbers = #tpu.dot_dimension_numbers<[1], [0], [0], [1], [0, 0, 1, 1], [], []>} : vector<64x32xf32>, vector<32x1xf32>, vector<64x1xf32> -> vector<64x1xf32>
    %cst_8 = arith.constant 7.812500e-03 : f32
    %8 = vector.broadcast %cst_8 : f32 to vector<64x1xf32>
    %9 = arith.mulf %7, %8 : vector<64x1xf32>
    %10 = vector.broadcast %9 : vector<64x1xf32> to vector<64x64xf32>
    %11 = arith.subf %1, %10 : vector<64x64xf32>
    %12 = arith.mulf %11, %11 : vector<64x64xf32>
    %cst_9 = arith.constant dense<0.000000e+00> : vector<64xf32>
    %13 = vector.multi_reduction <add>, %12, %cst_9 [1] : vector<64x64xf32> to vector<64xf32>
    %14 = vector.shape_cast %13 : vector<64xf32> to vector<64x1xf32>
    %c0_10 = arith.constant 0 : index
    %c0_11 = arith.constant 0 : index
    %15 = vector.load %arg4[%c0_10, %c0_11] : memref<32x64xf32, #tpu.memory_space<vmem>>, vector<32x64xf32>
    %cst_12 = arith.constant dense<0.000000e+00> : vector<32x1xf32>
    %16 = tpu.matmul %15, %14, %cst_12 {dimension_numbers = #tpu.dot_dimension_numbers<[1], [0], [0], [1], [0, 0, 1, 1], [], []>} : vector<32x64xf32>, vector<64x1xf32>, vector<32x1xf32> -> vector<32x1xf32>
    %c0_13 = arith.constant 0 : index
    %c0_14 = arith.constant 0 : index
    %17 = vector.load %arg5[%c0_13, %c0_14] : memref<64x32xf32, #tpu.memory_space<vmem>>, vector<64x32xf32>
    %cst_15 = arith.constant dense<0.000000e+00> : vector<64x1xf32>
    %18 = tpu.matmul %17, %16, %cst_15 {dimension_numbers = #tpu.dot_dimension_numbers<[1], [0], [0], [1], [0, 0, 1, 1], [], []>} : vector<64x32xf32>, vector<32x1xf32>, vector<64x1xf32> -> vector<64x1xf32>
    %cst_16 = arith.constant 7.812500e-03 : f32
    %19 = vector.broadcast %cst_16 : f32 to vector<64x1xf32>
    %20 = arith.mulf %18, %19 : vector<64x1xf32>
    %cst_17 = arith.constant 9.99999974E-6 : f32
    %21 = vector.broadcast %cst_17 : f32 to vector<64x1xf32>
    %22 = arith.addf %20, %21 : vector<64x1xf32>
    %23 = math.rsqrt %22 : vector<64x1xf32>
    %24 = vector.broadcast %23 : vector<64x1xf32> to vector<64x64xf32>
    %25 = arith.mulf %11, %24 : vector<64x64xf32>
    %c0_18 = arith.constant 0 : index
    %c0_19 = arith.constant 0 : index
    %26 = vector.load %arg2[%c0_18, %c0_19] : memref<64x1xf32, #tpu.memory_space<vmem>>, vector<64x1xf32>
    %27 = vector.broadcast %26 : vector<64x1xf32> to vector<64x64xf32>
    %28 = arith.mulf %25, %27 : vector<64x64xf32>
    %c0_20 = arith.constant 0 : index
    %c0_21 = arith.constant 0 : index
    %29 = vector.load %arg3[%c0_20, %c0_21] : memref<64x1xf32, #tpu.memory_space<vmem>>, vector<64x1xf32>
    %30 = vector.broadcast %29 : vector<64x1xf32> to vector<64x64xf32>
    %31 = arith.addf %28, %30 : vector<64x64xf32>
    %c0_22 = arith.constant 0 : index
    %c0_23 = arith.constant 0 : index
    %32 = vector.load %arg6[%c0_22, %c0_23] : memref<192x64xbf16, #tpu.memory_space<vmem>>, vector<192x64xbf16>
    %33 = arith.truncf %31 : vector<64x64xf32> to vector<64x64xbf16>
    %cst_24 = arith.constant dense<0.000000e+00> : vector<192x64xf32>
    %34 = tpu.matmul %32, %33, %cst_24 {dimension_numbers = #tpu.dot_dimension_numbers<[1], [0], [0], [1], [0, 0, 1, 1], [], []>} : vector<192x64xbf16>, vector<64x64xbf16>, vector<192x64xf32> -> vector<192x64xf32>
    %c0_25 = arith.constant 0 : index
    %c0_26 = arith.constant 0 : index
    %35 = vector.load %arg7[%c0_25, %c0_26] : memref<192x1xf32, #tpu.memory_space<vmem>>, vector<192x1xf32>
    %36 = vector.broadcast %35 : vector<192x1xf32> to vector<192x64xf32>
    %37 = arith.addf %34, %36 : vector<192x64xf32>
    %38 = vector.extract_strided_slice %37 {offsets = [0, 0], sizes = [16, 64], strides = [1, 1]} : vector<192x64xf32> to vector<16x64xf32>
    %39 = tpu.transpose %38, [1, 0] : vector<16x64xf32> -> vector<64x16xf32>
    %40 = arith.truncf %39 : vector<64x16xf32> to vector<64x16xbf16>
    %41 = vector.extract_strided_slice %37 {offsets = [64, 0], sizes = [16, 64], strides = [1, 1]} : vector<192x64xf32> to vector<16x64xf32>
    %42 = arith.truncf %41 : vector<16x64xf32> to vector<16x64xbf16>
    %43 = vector.extract_strided_slice %37 {offsets = [128, 0], sizes = [16, 64], strides = [1, 1]} : vector<192x64xf32> to vector<16x64xf32>
    %44 = arith.truncf %43 : vector<16x64xf32> to vector<16x64xbf16>
    %cst_27 = arith.constant dense<0.000000e+00> : vector<64x64xf32>
    %45 = tpu.matmul %40, %42, %cst_27 {dimension_numbers = #tpu.dot_dimension_numbers<[1], [0], [0], [1], [0, 0, 1, 1], [], []>} : vector<64x16xbf16>, vector<16x64xbf16>, vector<64x64xf32> -> vector<64x64xf32>
    %cst_28 = arith.constant dense<0xFF800000> : vector<64xf32>
    %46 = vector.multi_reduction <maximumf>, %45, %cst_28 [1] : vector<64x64xf32> to vector<64xf32>
    %47 = vector.shape_cast %46 : vector<64xf32> to vector<64x1xf32>
    %48 = vector.broadcast %47 : vector<64x1xf32> to vector<64x64xf32>
    %49 = arith.subf %45, %48 : vector<64x64xf32>
    %50 = math.exp %49 : vector<64x64xf32>
    %cst_29 = arith.constant dense<0.000000e+00> : vector<64xf32>
    %51 = vector.multi_reduction <add>, %50, %cst_29 [1] : vector<64x64xf32> to vector<64xf32>
    %52 = vector.shape_cast %51 : vector<64xf32> to vector<64x1xf32>
    %53 = tpu.reciprocal %52 {approx = true} : vector<64x1xf32> -> vector<64x1xf32>
    %54 = vector.broadcast %53 : vector<64x1xf32> to vector<64x64xf32>
    %55 = arith.mulf %50, %54 : vector<64x64xf32>
    %56 = arith.truncf %55 : vector<64x64xf32> to vector<64x64xbf16>
    %cst_30 = arith.constant dense<0.000000e+00> : vector<16x64xf32>
    %57 = tpu.matmul %44, %56, %cst_30 {dimension_numbers = #tpu.dot_dimension_numbers<[1], [1], [0], [0], [0, 0, 1, 0], [], []>} : vector<16x64xbf16>, vector<64x64xbf16>, vector<16x64xf32> -> vector<16x64xf32>
    %c0_31 = arith.constant 0 : index
    %c0_32 = arith.constant 0 : index
    %58 = vector.load %arg11[%c0_31, %c0_32] : memref<64x64xf32, #tpu.memory_space<vmem>>, vector<16x64xf32>
    tpu.vector_store %arg11[%c0_31, %c0_32], %57 {strides = array<i32>} : memref<64x64xf32, #tpu.memory_space<vmem>>, vector<16x64xf32>,
    %59 = vector.extract_strided_slice %37 {offsets = [16, 0], sizes = [16, 64], strides = [1, 1]} : vector<192x64xf32> to vector<16x64xf32>
    %60 = tpu.transpose %59, [1, 0] : vector<16x64xf32> -> vector<64x16xf32>
    %61 = arith.truncf %60 : vector<64x16xf32> to vector<64x16xbf16>
    %62 = vector.extract_strided_slice %37 {offsets = [80, 0], sizes = [16, 64], strides = [1, 1]} : vector<192x64xf32> to vector<16x64xf32>
    %63 = arith.truncf %62 : vector<16x64xf32> to vector<16x64xbf16>
    %64 = vector.extract_strided_slice %37 {offsets = [144, 0], sizes = [16, 64], strides = [1, 1]} : vector<192x64xf32> to vector<16x64xf32>
    %65 = arith.truncf %64 : vector<16x64xf32> to vector<16x64xbf16>
    %cst_33 = arith.constant dense<0.000000e+00> : vector<64x64xf32>
    %66 = tpu.matmul %61, %63, %cst_33 {dimension_numbers = #tpu.dot_dimension_numbers<[1], [0], [0], [1], [0, 0, 1, 1], [], []>} : vector<64x16xbf16>, vector<16x64xbf16>, vector<64x64xf32> -> vector<64x64xf32>
    %cst_34 = arith.constant dense<0xFF800000> : vector<64xf32>
    %67 = vector.multi_reduction <maximumf>, %66, %cst_34 [1] : vector<64x64xf32> to vector<64xf32>
    %68 = vector.shape_cast %67 : vector<64xf32> to vector<64x1xf32>
    %69 = vector.broadcast %68 : vector<64x1xf32> to vector<64x64xf32>
    %70 = arith.subf %66, %69 : vector<64x64xf32>
    %71 = math.exp %70 : vector<64x64xf32>
    %cst_35 = arith.constant dense<0.000000e+00> : vector<64xf32>
    %72 = vector.multi_reduction <add>, %71, %cst_35 [1] : vector<64x64xf32> to vector<64xf32>
    %73 = vector.shape_cast %72 : vector<64xf32> to vector<64x1xf32>
    %74 = tpu.reciprocal %73 {approx = true} : vector<64x1xf32> -> vector<64x1xf32>
    %75 = vector.broadcast %74 : vector<64x1xf32> to vector<64x64xf32>
    %76 = arith.mulf %71, %75 : vector<64x64xf32>
    %77 = arith.truncf %76 : vector<64x64xf32> to vector<64x64xbf16>
    %cst_36 = arith.constant dense<0.000000e+00> : vector<16x64xf32>
    %78 = tpu.matmul %65, %77, %cst_36 {dimension_numbers = #tpu.dot_dimension_numbers<[1], [1], [0], [0], [0, 0, 1, 0], [], []>} : vector<16x64xbf16>, vector<64x64xbf16>, vector<16x64xf32> -> vector<16x64xf32>
    %c16 = arith.constant 16 : index
    %c0_37 = arith.constant 0 : index
    %79 = vector.load %arg11[%c16, %c0_37] : memref<64x64xf32, #tpu.memory_space<vmem>>, vector<16x64xf32>
    tpu.vector_store %arg11[%c16, %c0_37], %78 {strides = array<i32>} : memref<64x64xf32, #tpu.memory_space<vmem>>, vector<16x64xf32>,
    %80 = vector.extract_strided_slice %37 {offsets = [32, 0], sizes = [16, 64], strides = [1, 1]} : vector<192x64xf32> to vector<16x64xf32>
    %81 = tpu.transpose %80, [1, 0] : vector<16x64xf32> -> vector<64x16xf32>
    %82 = arith.truncf %81 : vector<64x16xf32> to vector<64x16xbf16>
    %83 = vector.extract_strided_slice %37 {offsets = [96, 0], sizes = [16, 64], strides = [1, 1]} : vector<192x64xf32> to vector<16x64xf32>
    %84 = arith.truncf %83 : vector<16x64xf32> to vector<16x64xbf16>
    %85 = vector.extract_strided_slice %37 {offsets = [160, 0], sizes = [16, 64], strides = [1, 1]} : vector<192x64xf32> to vector<16x64xf32>
    %86 = arith.truncf %85 : vector<16x64xf32> to vector<16x64xbf16>
    %cst_38 = arith.constant dense<0.000000e+00> : vector<64x64xf32>
    %87 = tpu.matmul %82, %84, %cst_38 {dimension_numbers = #tpu.dot_dimension_numbers<[1], [0], [0], [1], [0, 0, 1, 1], [], []>} : vector<64x16xbf16>, vector<16x64xbf16>, vector<64x64xf32> -> vector<64x64xf32>
    %cst_39 = arith.constant dense<0xFF800000> : vector<64xf32>
    %88 = vector.multi_reduction <maximumf>, %87, %cst_39 [1] : vector<64x64xf32> to vector<64xf32>
    %89 = vector.shape_cast %88 : vector<64xf32> to vector<64x1xf32>
    %90 = vector.broadcast %89 : vector<64x1xf32> to vector<64x64xf32>
    %91 = arith.subf %87, %90 : vector<64x64xf32>
    %92 = math.exp %91 : vector<64x64xf32>
    %cst_40 = arith.constant dense<0.000000e+00> : vector<64xf32>
    %93 = vector.multi_reduction <add>, %92, %cst_40 [1] : vector<64x64xf32> to vector<64xf32>
    %94 = vector.shape_cast %93 : vector<64xf32> to vector<64x1xf32>
    %95 = tpu.reciprocal %94 {approx = true} : vector<64x1xf32> -> vector<64x1xf32>
    %96 = vector.broadcast %95 : vector<64x1xf32> to vector<64x64xf32>
    %97 = arith.mulf %92, %96 : vector<64x64xf32>
    %98 = arith.truncf %97 : vector<64x64xf32> to vector<64x64xbf16>
    %cst_41 = arith.constant dense<0.000000e+00> : vector<16x64xf32>
    %99 = tpu.matmul %86, %98, %cst_41 {dimension_numbers = #tpu.dot_dimension_numbers<[1], [1], [0], [0], [0, 0, 1, 0], [], []>} : vector<16x64xbf16>, vector<64x64xbf16>, vector<16x64xf32> -> vector<16x64xf32>
    %c32 = arith.constant 32 : index
    %c0_42 = arith.constant 0 : index
    %100 = vector.load %arg11[%c32, %c0_42] : memref<64x64xf32, #tpu.memory_space<vmem>>, vector<16x64xf32>
    tpu.vector_store %arg11[%c32, %c0_42], %99 {strides = array<i32>} : memref<64x64xf32, #tpu.memory_space<vmem>>, vector<16x64xf32>,
    %101 = vector.extract_strided_slice %37 {offsets = [48, 0], sizes = [16, 64], strides = [1, 1]} : vector<192x64xf32> to vector<16x64xf32>
    %102 = tpu.transpose %101, [1, 0] : vector<16x64xf32> -> vector<64x16xf32>
    %103 = arith.truncf %102 : vector<64x16xf32> to vector<64x16xbf16>
    %104 = vector.extract_strided_slice %37 {offsets = [112, 0], sizes = [16, 64], strides = [1, 1]} : vector<192x64xf32> to vector<16x64xf32>
    %105 = arith.truncf %104 : vector<16x64xf32> to vector<16x64xbf16>
    %106 = vector.extract_strided_slice %37 {offsets = [176, 0], sizes = [16, 64], strides = [1, 1]} : vector<192x64xf32> to vector<16x64xf32>
    %107 = arith.truncf %106 : vector<16x64xf32> to vector<16x64xbf16>
    %cst_43 = arith.constant dense<0.000000e+00> : vector<64x64xf32>
    %108 = tpu.matmul %103, %105, %cst_43 {dimension_numbers = #tpu.dot_dimension_numbers<[1], [0], [0], [1], [0, 0, 1, 1], [], []>} : vector<64x16xbf16>, vector<16x64xbf16>, vector<64x64xf32> -> vector<64x64xf32>
    %cst_44 = arith.constant dense<0xFF800000> : vector<64xf32>
    %109 = vector.multi_reduction <maximumf>, %108, %cst_44 [1] : vector<64x64xf32> to vector<64xf32>
    %110 = vector.shape_cast %109 : vector<64xf32> to vector<64x1xf32>
    %111 = vector.broadcast %110 : vector<64x1xf32> to vector<64x64xf32>
    %112 = arith.subf %108, %111 : vector<64x64xf32>
    %113 = math.exp %112 : vector<64x64xf32>
    %cst_45 = arith.constant dense<0.000000e+00> : vector<64xf32>
    %114 = vector.multi_reduction <add>, %113, %cst_45 [1] : vector<64x64xf32> to vector<64xf32>
    %115 = vector.shape_cast %114 : vector<64xf32> to vector<64x1xf32>
    %116 = tpu.reciprocal %115 {approx = true} : vector<64x1xf32> -> vector<64x1xf32>
    %117 = vector.broadcast %116 : vector<64x1xf32> to vector<64x64xf32>
    %118 = arith.mulf %113, %117 : vector<64x64xf32>
    %119 = arith.truncf %118 : vector<64x64xf32> to vector<64x64xbf16>
    %cst_46 = arith.constant dense<0.000000e+00> : vector<16x64xf32>
    %120 = tpu.matmul %107, %119, %cst_46 {dimension_numbers = #tpu.dot_dimension_numbers<[1], [1], [0], [0], [0, 0, 1, 0], [], []>} : vector<16x64xbf16>, vector<64x64xbf16>, vector<16x64xf32> -> vector<16x64xf32>
    %c48 = arith.constant 48 : index
    %c0_47 = arith.constant 0 : index
    %121 = vector.load %arg11[%c48, %c0_47] : memref<64x64xf32, #tpu.memory_space<vmem>>, vector<16x64xf32>
    tpu.vector_store %arg11[%c48, %c0_47], %120 {strides = array<i32>} : memref<64x64xf32, #tpu.memory_space<vmem>>, vector<16x64xf32>,
    %c0_48 = arith.constant 0 : index
    %c0_49 = arith.constant 0 : index
    %122 = vector.load %arg8[%c0_48, %c0_49] : memref<64x64xbf16, #tpu.memory_space<vmem>>, vector<64x64xbf16>
    %c0_50 = arith.constant 0 : index
    %c0_51 = arith.constant 0 : index
    %123 = vector.load %arg11[%c0_50, %c0_51] : memref<64x64xf32, #tpu.memory_space<vmem>>, vector<64x64xf32>
    %124 = arith.truncf %123 : vector<64x64xf32> to vector<64x64xbf16>
    %cst_52 = arith.constant dense<0.000000e+00> : vector<64x64xf32>
    %125 = tpu.matmul %122, %124, %cst_52 {dimension_numbers = #tpu.dot_dimension_numbers<[1], [0], [0], [1], [0, 0, 1, 1], [], []>} : vector<64x64xbf16>, vector<64x64xbf16>, vector<64x64xf32> -> vector<64x64xf32>
    %c0_53 = arith.constant 0 : index
    %c0_54 = arith.constant 0 : index
    %126 = vector.load %arg9[%c0_53, %c0_54] : memref<64x1xf32, #tpu.memory_space<vmem>>, vector<64x1xf32>
    %127 = vector.broadcast %126 : vector<64x1xf32> to vector<64x64xf32>
    %128 = arith.addf %125, %127 : vector<64x64xf32>
    %129 = arith.addf %1, %128 : vector<64x64xf32>
    %c0_55 = arith.constant 0 : index
    %c0_56 = arith.constant 0 : index
    %c0_57 = arith.constant 0 : index
    %130 = vector.load %arg10[%c0_55, %c0_56, %c0_57] : memref<1x64x64xf32, #tpu.memory_space<vmem>>, vector<1x64x64xf32>
    %131 = vector.shape_cast %130 : vector<1x64x64xf32> to vector<64x64xf32>
    %132 = vector.shape_cast %129 : vector<64x64xf32> to vector<1x64x64xf32>
    tpu.vector_store %arg10[%c0_55, %c0_56, %c0_57], %132 {strides = array<i32>} : memref<1x64x64xf32, #tpu.memory_space<vmem>>, vector<1x64x64xf32>,
    return
  }
  func.func @transform_0(%arg0: i32) -> (i32, i32, i32) {
    %c0_i32 = arith.constant 0 : i32
    %c0_i32_0 = arith.constant 0 : i32
    %c0_i32_1 = arith.constant 0 : i32
    return %arg0, %c0_i32, %c0_i32_0 : i32, i32, i32
  }
  func.func @transform_1(%arg0: i32) -> (i32, i32) {
    %c0_i32 = arith.constant 0 : i32
    %c0_i32_0 = arith.constant 0 : i32
    %c0_i32_1 = arith.constant 0 : i32
    return %c0_i32, %c0_i32_0 : i32, i32
  }
  func.func @transform_2(%arg0: i32) -> (i32, i32) {
    %c0_i32 = arith.constant 0 : i32
    %c0_i32_0 = arith.constant 0 : i32
    %c0_i32_1 = arith.constant 0 : i32
    return %c0_i32, %c0_i32_0 : i32, i32
  }
  func.func @transform_3(%arg0: i32) -> (i32, i32) {
    %c0_i32 = arith.constant 0 : i32
    %c0_i32_0 = arith.constant 0 : i32
    %c0_i32_1 = arith.constant 0 : i32
    return %c0_i32, %c0_i32_0 : i32, i32
  }
  func.func @transform_4(%arg0: i32) -> (i32, i32) {
    %c0_i32 = arith.constant 0 : i32
    %c0_i32_0 = arith.constant 0 : i32
    %c0_i32_1 = arith.constant 0 : i32
    return %c0_i32, %c0_i32_0 : i32, i32
  }
  func.func @transform_5(%arg0: i32) -> (i32, i32) {
    %c0_i32 = arith.constant 0 : i32
    %c0_i32_0 = arith.constant 0 : i32
    %c0_i32_1 = arith.constant 0 : i32
    return %c0_i32, %c0_i32_0 : i32, i32
  }
  func.func @transform_6(%arg0: i32) -> (i32, i32) {
    %c0_i32 = arith.constant 0 : i32
    %c0_i32_0 = arith.constant 0 : i32
    %c0_i32_1 = arith.constant 0 : i32
    return %c0_i32, %c0_i32_0 : i32, i32
  }
  func.func @transform_7(%arg0: i32) -> (i32, i32) {
    %c0_i32 = arith.constant 0 : i32
    %c0_i32_0 = arith.constant 0 : i32
    %c0_i32_1 = arith.constant 0 : i32
    return %c0_i32, %c0_i32_0 : i32, i32
  }
  func.func @transform_8(%arg0: i32) -> (i32, i32) {
    %c0_i32 = arith.constant 0 : i32
    %c0_i32_0 = arith.constant 0 : i32
    %c0_i32_1 = arith.constant 0 : i32
    return %c0_i32, %c0_i32_0 : i32, i32
  }
  func.func @transform_9(%arg0: i32) -> (i32, i32, i32) {
    %c0_i32 = arith.constant 0 : i32
    %c0_i32_0 = arith.constant 0 : i32
    %c0_i32_1 = arith.constant 0 : i32
    return %arg0, %c0_i32, %c0_i32_0 : i32, i32, i32
  }
}

</mosaic_0001>

<llo_original>
// kernel: tpu_custom_call.1
$region0: #{tpu_custom_call.1}
  #allocation0 [shape = 'u32[]', space=smem, size = 0x4, offset = 0x4, fixed_abs, tag = 'smem constant byte address 0x4 - core index']
  #allocation1 [shape = 'u32[144,128]{1,0:T(1,128)}', space=vmem, size = 0x12000, scoped, tag = 'internal scratch']
  #allocation2 [shape = 'f32[64,64]{1,0:T(8,128)}', space=vmem, size = 0x8000, scoped, tag = 'scratch operand']
  %s0 = inlined_call_operand.vmem [shape: f32[2,64,64], index: 0, kind: input, shape index: {}]
  %s1 = inlined_call_operand.vmem [shape: f32[64,1], index: 1, kind: input, shape index: {}]
  %s2 = inlined_call_operand.vmem [shape: f32[64,1], index: 2, kind: input, shape index: {}]
  %s3 = inlined_call_operand.vmem [shape: f32[32,64], index: 3, kind: input, shape index: {}]
  %s4 = inlined_call_operand.vmem [shape: f32[64,32], index: 4, kind: input, shape index: {}]
  %s5 = inlined_call_operand.vmem [shape: bf16[192,64], index: 5, kind: input, shape index: {}]
  %s6 = inlined_call_operand.vmem [shape: f32[192,1], index: 6, kind: input, shape index: {}]
  %s7 = inlined_call_operand.vmem [shape: bf16[64,64], index: 7, kind: input, shape index: {}]
  %s8 = inlined_call_operand.vmem [shape: f32[64,1], index: 8, kind: input, shape index: {}]
  %s9 = inlined_call_operand.hbm [shape: f32[2,64,64], index: 9, kind: output, shape index: {}]
  %s10 = sld [smem:[#allocation0]]
  $region69: #{tpu_custom_call.1} parent=0
    _
  %s12 = ssub.s32 1, %s10
  %s13 = scalar_select 0, %s12, %s10
  $region1: #{tpu_custom_call.1} parent=0
    #allocation3 [shape = 'u8[65536]{0}', space=vmem, size = 0x10000, scoped, tag = 'output window, operand 0']
    #allocation4 [shape = 's32[2]{0}', space=sflag, size = 0x8, scoped, tag = 'scoped memory for tpu_custom_call.1']
    %14 = vsyncpa [#allocation4], 0
    %s15 = scalar_lea.sflag [#allocation4], 1
    %16 = vsyncpa %s15, 0
    loop: start=0, step=1, limit=4
    $region2: #{tpu_custom_call.1} parent=1 // loop_pre_header
      _
    $region3: #{tpu_custom_call.1} parent=1 // loop_header
      %s18 = sphi 0, %s22
      %p19 = scmp.ge.s32.totalorder %s18, 4
      %s28 = sphi 0, %s30
      %s31 = sphi 0, %s28
      %s32 = sphi 0, %s31
      %s48 = sphi 0, %s32
      %s52 = sphi 0, %s52
      %s54 = sphi 0, %s52
      %s55 = sphi 0, %s54
      %s69 = sphi 0, %s55
      %s73 = sphi 0, %s73
      %s75 = sphi 0, %s73
      %s76 = sphi 0, %s75
      %s90 = sphi 0, %s76
      %s94 = sphi 0, %s94
      %s96 = sphi 0, %s94
      %s97 = sphi 0, %s96
      %s111 = sphi 0, %s97
      %s115 = sphi 0, %s115
      %s117 = sphi 0, %s115
      %s118 = sphi 0, %s117
      %s132 = sphi 0, %s118
      %s136 = sphi 0, %s136
      %s138 = sphi 0, %s136
      %s139 = sphi 0, %s138
      %s153 = sphi 0, %s139
      %s157 = sphi 0, %s157
      %s159 = sphi 0, %s157
      %s160 = sphi 0, %s159
      %s174 = sphi 0, %s160
      %s178 = sphi 0, %s178
      %s180 = sphi 0, %s178
      %s181 = sphi 0, %s180
      %s195 = sphi 0, %s181
      %s199 = sphi 0, %s199
      %s201 = sphi 0, %s199
      %s202 = sphi 0, %s201
      %s216 = sphi 0, %s202
      %s222 = sphi 0, %s224
      %s225 = sphi 0, %s222
      %s226 = sphi 0, %s225
      %s242 = sphi 0, %s226
    $region4: #{tpu_custom_call.1} parent=1 // loop_header_branch
      %21 = sbr.rel (%p19) target = $region8
    $region5: #{tpu_custom_call.1} parent=1 // loop_body
      %s23 = ssub.s32 %s18, 1
      %s24 = ssub.s32 %s18, 2
      %s25 = sadd.s32 %s18, 1
      %s26 = ssub.s32 %s18, %s25
      %p27 = scmp.eq.s32.totalorder %s26, 0
      %s29 = sadd.s32 %s28, 1
      %s30 = scalar_select %p27, %s28, %s29
      %p33 = pneg %p27
      %p34 = scmp.eq.s32.totalorder %s18, 1
      %p35 = por %p33, %p34
      %p36 = scmp.ne.s32.totalorder %s28, %s31
      %p37 = scmp.eq.s32.totalorder %s18, 0
      %p38 = por %p36, %p37
      %p39 = scmp.ne.s32.totalorder %s28, %s31
      %p40 = scmp.eq.s32.totalorder %s23, 1
      %p41 = por %p39, %p40
      %p42 = scmp.ne.s32.totalorder %s31, %s32
      %p43 = scmp.eq.s32.totalorder %s23, 0
      %p44 = por %p42, %p43
      %p45 = scmp.ne.s32.totalorder %s31, %s32
      %p46 = scmp.eq.s32.totalorder %s24, 1
      %p47 = por %p45, %p46
      %p49 = scmp.ne.s32.totalorder %s32, %s48
      %p50 = scmp.eq.s32.totalorder %s24, 0
      %p51 = por %p49, %p50
      %s53 = sadd.s32 %s52, 1
      %p56 = scmp.eq.s32.totalorder %s18, 1
      %p57 = scmp.ne.s32.totalorder %s52, %s54
      %p58 = scmp.eq.s32.totalorder %s18, 0
      %p59 = por %p57, %p58
      %p60 = scmp.ne.s32.totalorder %s52, %s54
      %p61 = scmp.eq.s32.totalorder %s23, 1
      %p62 = por %p60, %p61
      %p63 = scmp.ne.s32.totalorder %s54, %s55
      %p64 = scmp.eq.s32.totalorder %s23, 0
      %p65 = por %p63, %p64
      %p66 = scmp.ne.s32.totalorder %s54, %s55
      %p67 = scmp.eq.s32.totalorder %s24, 1
      %p68 = por %p66, %p67
      %p70 = scmp.ne.s32.totalorder %s55, %s69
      %p71 = scmp.eq.s32.totalorder %s24, 0
      %p72 = por %p70, %p71
      %s74 = sadd.s32 %s73, 1
      %p77 = scmp.eq.s32.totalorder %s18, 1
      %p78 = scmp.ne.s32.totalorder %s73, %s75
      %p79 = scmp.eq.s32.totalorder %s18, 0
      %p80 = por %p78, %p79
      %p81 = scmp.ne.s32.totalorder %s73, %s75
      %p82 = scmp.eq.s32.totalorder %s23, 1
      %p83 = por %p81, %p82
      %p84 = scmp.ne.s32.totalorder %s75, %s76
      %p85 = scmp.eq.s32.totalorder %s23, 0
      %p86 = por %p84, %p85
      %p87 = scmp.ne.s32.totalorder %s75, %s76
      %p88 = scmp.eq.s32.totalorder %s24, 1
      %p89 = por %p87, %p88
      %p91 = scmp.ne.s32.totalorder %s76, %s90
      %p92 = scmp.eq.s32.totalorder %s24, 0
      %p93 = por %p91, %p92
      %s95 = sadd.s32 %s94, 1
      %p98 = scmp.eq.s32.totalorder %s18, 1
      %p99 = scmp.ne.s32.totalorder %s94, %s96
      %p100 = scmp.eq.s32.totalorder %s18, 0
      %p101 = por %p99, %p100
      %p102 = scmp.ne.s32.totalorder %s94, %s96
      %p103 = scmp.eq.s32.totalorder %s23, 1
      %p104 = por %p102, %p103
      %p105 = scmp.ne.s32.totalorder %s96, %s97
      %p106 = scmp.eq.s32.totalorder %s23, 0
      %p107 = por %p105, %p106
      %p108 = scmp.ne.s32.totalorder %s96, %s97
      %p109 = scmp.eq.s32.totalorder %s24, 1
      %p110 = por %p108, %p109
      %p112 = scmp.ne.s32.totalorder %s97, %s111
      %p113 = scmp.eq.s32.totalorder %s24, 0
      %p114 = por %p112, %p113
      %s116 = sadd.s32 %s115, 1
      %p119 = scmp.eq.s32.totalorder %s18, 1
      %p120 = scmp.ne.s32.totalorder %s115, %s117
      %p121 = scmp.eq.s32.totalorder %s18, 0
      %p122 = por %p120, %p121
      %p123 = scmp.ne.s32.totalorder %s115, %s117
      %p124 = scmp.eq.s32.totalorder %s23, 1
      %p125 = por %p123, %p124
      %p126 = scmp.ne.s32.totalorder %s117, %s118
      %p127 = scmp.eq.s32.totalorder %s23, 0
      %p128 = por %p126, %p127
      %p129 = scmp.ne.s32.totalorder %s117, %s118
      %p130 = scmp.eq.s32.totalorder %s24, 1
      %p131 = por %p129, %p130
      %p133 = scmp.ne.s32.totalorder %s118, %s132
      %p134 = scmp.eq.s32.totalorder %s24, 0
      %p135 = por %p133, %p134
      %s137 = sadd.s32 %s136, 1
      %p140 = scmp.eq.s32.totalorder %s18, 1
      %p141 = scmp.ne.s32.totalorder %s136, %s138
      %p142 = scmp.eq.s32.totalorder %s18, 0
      %p143 = por %p141, %p142
      %p144 = scmp.ne.s32.totalorder %s136, %s138
      %p145 = scmp.eq.s32.totalorder %s23, 1
      %p146 = por %p144, %p145
      %p147 = scmp.ne.s32.totalorder %s138, %s139
      %p148 = scmp.eq.s32.totalorder %s23, 0
      %p149 = por %p147, %p148
      %p150 = scmp.ne.s32.totalorder %s138, %s139
      %p151 = scmp.eq.s32.totalorder %s24, 1
      %p152 = por %p150, %p151
      %p154 = scmp.ne.s32.totalorder %s139, %s153
      %p155 = scmp.eq.s32.totalorder %s24, 0
      %p156 = por %p154, %p155
      %s158 = sadd.s32 %s157, 1
      %p161 = scmp.eq.s32.totalorder %s18, 1
      %p162 = scmp.ne.s32.totalorder %s157, %s159
      %p163 = scmp.eq.s32.totalorder %s18, 0
      %p164 = por %p162, %p163
      %p165 = scmp.ne.s32.totalorder %s157, %s159
      %p166 = scmp.eq.s32.totalorder %s23, 1
      %p167 = por %p165, %p166
      %p168 = scmp.ne.s32.totalorder %s159, %s160
      %p169 = scmp.eq.s32.totalorder %s23, 0
      %p170 = por %p168, %p169
      %p171 = scmp.ne.s32.totalorder %s159, %s160
      %p172 = scmp.eq.s32.totalorder %s24, 1
      %p173 = por %p171, %p172
      %p175 = scmp.ne.s32.totalorder %s160, %s174
      %p176 = scmp.eq.s32.totalorder %s24, 0
      %p177 = por %p175, %p176
      %s179 = sadd.s32 %s178, 1
      %p182 = scmp.eq.s32.totalorder %s18, 1
      %p183 = scmp.ne.s32.totalorder %s178, %s180
      %p184 = scmp.eq.s32.totalorder %s18, 0
      %p185 = por %p183, %p184
      %p186 = scmp.ne.s32.totalorder %s178, %s180
      %p187 = scmp.eq.s32.totalorder %s23, 1
      %p188 = por %p186, %p187
      %p189 = scmp.ne.s32.totalorder %s180, %s181
      %p190 = scmp.eq.s32.totalorder %s23, 0
      %p191 = por %p189, %p190
      %p192 = scmp.ne.s32.totalorder %s180, %s181
      %p193 = scmp.eq.s32.totalorder %s24, 1
      %p194 = por %p192, %p193
      %p196 = scmp.ne.s32.totalorder %s181, %s195
      %p197 = scmp.eq.s32.totalorder %s24, 0
      %p198 = por %p196, %p197
      %s200 = sadd.s32 %s199, 1
      %p203 = scmp.eq.s32.totalorder %s18, 1
      %p204 = scmp.ne.s32.totalorder %s199, %s201
      %p205 = scmp.eq.s32.totalorder %s18, 0
      %p206 = por %p204, %p205
      %p207 = scmp.ne.s32.totalorder %s199, %s201
      %p208 = scmp.eq.s32.totalorder %s23, 1
      %p209 = por %p207, %p208
      %p210 = scmp.ne.s32.totalorder %s201, %s202
      %p211 = scmp.eq.s32.totalorder %s23, 0
      %p212 = por %p210, %p211
      %p213 = scmp.ne.s32.totalorder %s201, %s202
      %p214 = scmp.eq.s32.totalorder %s24, 1
      %p215 = por %p213, %p214
      %p217 = scmp.ne.s32.totalorder %s202, %s216
      %p218 = scmp.eq.s32.totalorder %s24, 0
      %p219 = por %p217, %p218
      %s220 = ssub.s32 %s18, %s25
      %p221 = scmp.eq.s32.totalorder %s220, 0
      %s223 = sadd.s32 %s222, 1
      %s224 = scalar_select %p221, %s222, %s223
      %p227 = pneg %p221
      %p228 = scmp.eq.s32.totalorder %s18, 1
      %p229 = por %p227, %p228
      %p230 = scmp.ne.s32.totalorder %s222, %s225
      %p231 = scmp.eq.s32.totalorder %s18, 0
      %p232 = por %p230, %p231
      %p233 = scmp.ne.s32.totalorder %s222, %s225
      %p234 = scmp.eq.s32.totalorder %s23, 1
      %p235 = por %p233, %p234
      %p236 = scmp.ne.s32.totalorder %s225, %s226
      %p237 = scmp.eq.s32.totalorder %s23, 0
      %p238 = por %p236, %p237
      %p239 = scmp.ne.s32.totalorder %s225, %s226
      %p240 = scmp.eq.s32.totalorder %s24, 1
      %p241 = por %p239, %p240
      %p243 = scmp.ne.s32.totalorder %s226, %s242
      %p244 = scmp.eq.s32.totalorder %s24, 0
      %p245 = por %p243, %p244
      %p246 = scmp.le.s32.totalorder 1, %s18
      %p247 = scmp.lt.s32.totalorder %s18, 3
      %p248 = pnand %p246, %p247
      %p249 = pneg %p248
      // Predicated region
      $region9: #{tpu_custom_call.1} parent=5 // pred_check
        _
      $region10: #{tpu_custom_call.1} parent=5 // pred_check_branch
        %251 = sbr.rel (%p248) target = $region12
      $region11: #{tpu_custom_call.1} parent=5 // pred_region
        %s252 = ssub.s32 %s18, 1
        // Predicated region
        $region13: #{tpu_custom_call.1} parent=11 // pred_check
          %p253 = pneg %p65
        $region14: #{tpu_custom_call.1} parent=11 // pred_check_branch
          %255 = sbr.rel (%p253) target = $region16
        $region15: #{tpu_custom_call.1} parent=11 // pred_region
          _
        $region16: #{tpu_custom_call.1} parent=11 // pred_fallthru
          _
        // Predicated region
        $region17: #{tpu_custom_call.1} parent=11 // pred_check
          %p256 = pneg %p86
        $region18: #{tpu_custom_call.1} parent=11 // pred_check_branch
          %258 = sbr.rel (%p256) target = $region20
        $region19: #{tpu_custom_call.1} parent=11 // pred_region
          _
        $region20: #{tpu_custom_call.1} parent=11 // pred_fallthru
          _
        // Predicated region
        $region21: #{tpu_custom_call.1} parent=11 // pred_check
          %p259 = pneg %p107
        $region22: #{tpu_custom_call.1} parent=11 // pred_check_branch
          %261 = sbr.rel (%p259) target = $region24
        $region23: #{tpu_custom_call.1} parent=11 // pred_region
          _
        $region24: #{tpu_custom_call.1} parent=11 // pred_fallthru
          _
        // Predicated region
        $region25: #{tpu_custom_call.1} parent=11 // pred_check
          %p262 = pneg %p128
        $region26: #{tpu_custom_call.1} parent=11 // pred_check_branch
          %264 = sbr.rel (%p262) target = $region28
        $region27: #{tpu_custom_call.1} parent=11 // pred_region
          _
        $region28: #{tpu_custom_call.1} parent=11 // pred_fallthru
          _
        // Predicated region
        $region29: #{tpu_custom_call.1} parent=11 // pred_check
          %p265 = pneg %p149
        $region30: #{tpu_custom_call.1} parent=11 // pred_check_branch
          %267 = sbr.rel (%p265) target = $region32
        $region31: #{tpu_custom_call.1} parent=11 // pred_region
          _
        $region32: #{tpu_custom_call.1} parent=11 // pred_fallthru
          _
        // Predicated region
        $region33: #{tpu_custom_call.1} parent=11 // pred_check
          %p268 = pneg %p170
        $region34: #{tpu_custom_call.1} parent=11 // pred_check_branch
          %270 = sbr.rel (%p268) target = $region36
        $region35: #{tpu_custom_call.1} parent=11 // pred_region
          _
        $region36: #{tpu_custom_call.1} parent=11 // pred_fallthru
          _
        // Predicated region
        $region37: #{tpu_custom_call.1} parent=11 // pred_check
          %p271 = pneg %p191
        $region38: #{tpu_custom_call.1} parent=11 // pred_check_branch
          %273 = sbr.rel (%p271) target = $region40
        $region39: #{tpu_custom_call.1} parent=11 // pred_region
          _
        $region40: #{tpu_custom_call.1} parent=11 // pred_fallthru
          _
        // Predicated region
        $region41: #{tpu_custom_call.1} parent=11 // pred_check
          %p274 = pneg %p212
        $region42: #{tpu_custom_call.1} parent=11 // pred_check_branch
          %276 = sbr.rel (%p274) target = $region44
        $region43: #{tpu_custom_call.1} parent=11 // pred_region
          _
        $region44: #{tpu_custom_call.1} parent=11 // pred_fallthru
          _
      $region12: #{tpu_custom_call.1} parent=5 // pred_fallthru
        _
      %p277 = scmp.lt.s32.totalorder %s18, 2
      // Predicated region
      $region45: #{tpu_custom_call.1} parent=5 // pred_check
        %p278 = pneg %p277
      $region46: #{tpu_custom_call.1} parent=5 // pred_check_branch
        %280 = sbr.rel (%p278) target = $region48
      $region47: #{tpu_custom_call.1} parent=5 // pred_region
        // Predicated region
        $region49: #{tpu_custom_call.1} parent=47 // pred_check
          %p281 = pneg %p38
        $region50: #{tpu_custom_call.1} parent=47 // pred_check_branch
          %283 = sbr.rel (%p281) target = $region52
        $region51: #{tpu_custom_call.1} parent=47 // pred_region
          %p284 = scmp.lt.s32.totalorder %s18, 1
          %s285 = scalar_select %p284, %s18, 1
          %s286 = smul.addr %s285, 8
          %s287 = smul.addr %s286, 8
          %s288 = scalar_lea.vmem %s0, %s287
        $region52: #{tpu_custom_call.1} parent=47 // pred_fallthru
          _
      $region48: #{tpu_custom_call.1} parent=5 // pred_fallthru
        _
      %p289 = scmp.le.s32.totalorder 1, %s18
      %p290 = scmp.lt.s32.totalorder %s18, 3
      %p291 = pnand %p289, %p290
      %p292 = pneg %p291
      // Predicated region
      $region53: #{tpu_custom_call.1} parent=5 // pred_check
        _
      $region54: #{tpu_custom_call.1} parent=5 // pred_check_branch
        %294 = sbr.rel (%p291) target = $region56
      $region55: #{tpu_custom_call.1} parent=5 // pred_region
        %s295 = ssub.s32 %s18, 1
        %p296 = scmp.lt.s32.totalorder %s23, 1
        %s297 = scalar_select %p296, %s23, 1
        %s298 = smul.addr %s297, 8
        %s299 = smul.addr %s298, 8
        %s300 = scalar_lea.vmem %s0, %s299
        %p301 = pneg %p44
        %p302 = pneg %p41
        %p303 = pneg %p65
        %p304 = pneg %p62
        %p305 = pneg %p86
        %p306 = pneg %p83
        %p307 = pneg %p107
        %p308 = pneg %p104
        %p309 = pneg %p128
        %p310 = pneg %p125
        %p311 = pneg %p149
        %p312 = pneg %p146
        %p313 = pneg %p170
        %p314 = pneg %p167
        %p315 = pneg %p191
        %p316 = pneg %p188
        %p317 = pneg %p212
        %p318 = pneg %p209
        %p319 = pneg %p238
        %p320 = pneg %p235
        %s321 = sand.u32 %s225, 1
        %s322 = scalar_lea.sflag [#allocation4], %s321
        %s323 = sand.u32 %s225, 1
        %s324 = smul.addr %s323, 64
        %s325 = scalar_lea.vmem [#allocation3], %s324
        %p326 = scmp.lt.s32.totalorder %s23, 1
        %s327 = scalar_select %p326, %s23, 1
        %s328 = smul.addr %s327, 8
        %s329 = smul.addr %s328, 8
        %s330 = scalar_lea.vmem %s0, %s329
        %v332 = vld [vmem:[%s330] sm:$0xff]
        %v333 = vld [vmem:[%s330 + $0x8] sm:$0xff]
        %v334 = vld [vmem:[%s330 + $0x10] sm:$0xff]
        %v335 = vld [vmem:[%s330 + $0x18] sm:$0xff]
        %v336 = vld [vmem:[%s330 + $0x20] sm:$0xff]
        %v337 = vld [vmem:[%s330 + $0x28] sm:$0xff]
        %v338 = vld [vmem:[%s330 + $0x30] sm:$0xff]
        %v339 = vld [vmem:[%s330 + $0x38] sm:$0xff]
        %vm340 = vcmask 523264
        %v341 = vsel %vm340, %v332, 0.0
        %342 = vadd.xlane.f32.xlu0 %v341
        %v343 = vpop.xlane.xlu0 %342
        %v344 = vsel %vm340, %v333, 0.0
        %345 = vadd.xlane.f32.xlu0 %v344
        %v346 = vpop.xlane.xlu0 %345
        %v347 = vsel %vm340, %v334, 0.0
        %348 = vadd.xlane.f32.xlu0 %v347
        %v349 = vpop.xlane.xlu0 %348
        %v350 = vsel %vm340, %v335, 0.0
        %351 = vadd.xlane.f32.xlu0 %v350
        %v352 = vpop.xlane.xlu0 %351
        %v353 = vsel %vm340, %v336, 0.0
        %354 = vadd.xlane.f32.xlu0 %v353
        %v355 = vpop.xlane.xlu0 %354
        %v356 = vsel %vm340, %v337, 0.0
        %357 = vadd.xlane.f32.xlu0 %v356
        %v358 = vpop.xlane.xlu0 %357
        %v359 = vsel %vm340, %v338, 0.0
        %360 = vadd.xlane.f32.xlu0 %v359
        %v361 = vpop.xlane.xlu0 %360
        %v362 = vsel %vm340, %v339, 0.0
        %363 = vadd.xlane.f32.xlu0 %v362
        %v364 = vpop.xlane.xlu0 %363
        %v365 = vld [vmem:[%s3] sm:$0xff]
        %v366 = vld [vmem:[%s3 + $0x8] sm:$0xff]
        %v367 = vld [vmem:[%s3 + $0x10] sm:$0xff]
        %v368 = vld [vmem:[%s3 + $0x18] sm:$0xff]
        %v370 = vsel %vm340, %v365, 0
        %v373 = vsel %vm340, %v366, 0
        %v376 = vsel %vm340, %v367, 0
        %v379 = vsel %vm340, %v368, 0
        %381 = vmatprep.subr.mxu0 0.0
        %382 = vmatpush1.msra.mxu0 %v343
        %383 = vmatprep.subr.mxu0 0.0
        %384 = vmatpush1.msra.mxu0 %v346
        %385 = vmatprep.subr.mxu0 0.0
        %386 = vmatpush1.msra.mxu0 %v349
        %387 = vmatprep.subr.mxu0 0.0
        %388 = vmatpush1.msra.mxu0 %v352
        %389 = vmatprep.subr.mxu0 0.0
        %390 = vmatpush1.msra.mxu0 %v355
        %391 = vmatprep.subr.mxu0 0.0
        %392 = vmatpush1.msra.mxu0 %v358
        %393 = vmatprep.subr.mxu0 0.0
        %394 = vmatpush1.msra.mxu0 %v361
        %395 = vmatprep.subr.mxu0 0.0
        %396 = vmatpush1.msra.mxu0 %v364
        %397 = vmatprep.subr.mxu0 0.0
        %398 = vmatpush1.msra.mxu0 0.0
        %399 = vmatprep.subr.mxu0 0.0
        %400 = vmatpush1.msra.mxu0 0.0
        %401 = vmatprep.subr.mxu0 0.0
        %402 = vmatpush1.msra.mxu0 0.0
        %403 = vmatprep.subr.mxu0 0.0
        %404 = vmatpush1.msra.mxu0 0.0
        %405 = vmatprep.subr.mxu0 0.0
        %406 = vmatpush1.msra.mxu0 0.0
        %407 = vmatprep.subr.mxu0 0.0
        %408 = vmatpush1.msra.mxu0 0.0
        %409 = vmatprep.subr.mxu0 0.0
        %410 = vmatpush1.msra.mxu0 0.0
        %411 = vmatprep.subr.mxu0 0.0
        %412 = vmatpush1.msra.mxu0 0.0
        %413 = vmatprep.subr.mxu0 0.0
        %414 = vmatpush1.msra.mxu0 0.0
        %415 = vmatprep.subr.mxu0 0.0
        %416 = vmatpush1.msra.mxu0 0.0
        %417 = vmatprep.subr.mxu0 0.0
        %418 = vmatpush1.msra.mxu0 0.0
        %419 = vmatprep.subr.mxu0 0.0
        %420 = vmatpush1.msra.mxu0 0.0
        %421 = vmatprep.subr.mxu0 0.0
        %422 = vmatpush1.msra.mxu0 0.0
        %423 = vmatprep.subr.mxu0 0.0
        %424 = vmatpush1.msra.mxu0 0.0
        %425 = vmatprep.subr.mxu0 0.0
        %426 = vmatpush1.msra.mxu0 0.0
        %427 = vmatprep.subr.mxu0 0.0
        %428 = vmatpush1.msra.mxu0 0.0
        %429 = vmatprep.subr.mxu0 0.0
        %430 = vmatpush1.msra.mxu0 0.0
        %431 = vmatprep.subr.mxu0 0.0
        %432 = vmatpush1.msra.mxu0 0.0
        %433 = vmatprep.subr.mxu0 0.0
        %434 = vmatpush1.msra.mxu0 0.0
        %435 = vmatprep.subr.mxu0 0.0
        %436 = vmatpush1.msra.mxu0 0.0
        %437 = vmatprep.subr.mxu0 0.0
        %438 = vmatpush1.msra.mxu0 0.0
        %439 = vmatprep.subr.mxu0 0.0
        %440 = vmatpush1.msra.mxu0 0.0
        %441 = vmatprep.subr.mxu0 0.0
        %442 = vmatpush1.msra.mxu0 0.0
        %443 = vmatprep.subr.mxu0 0.0
        %444 = vmatpush1.msra.mxu0 0.0
        %445 = vmatprep.mubr.f32.mxu0 0.0
        %446 = vmatmul.mubr.f32.gmra.mrb[0].mxu0 %v370
        %v447 = vpop.f32.mrb[0].mxu0
        %v448 = vadd.f32 0.0, %v447
        %v449 = vpop.f32.mrb[0].mxu0
        %450 = vmatprep.mubr.f32.mxu0 0.0
        %451 = vmatmul.mubr.f32.gmra.mrb[0].mxu0 %v373
        %v452 = vpop.f32.mrb[0].mxu0
        %v453 = vadd.f32 0.0, %v452
        %v454 = vpop.f32.mrb[0].mxu0
        %455 = vmatprep.mubr.f32.mxu0 0.0
        %456 = vmatmul.mubr.f32.gmra.mrb[0].mxu0 %v376
        %v457 = vpop.f32.mrb[0].mxu0
        %v458 = vadd.f32 0.0, %v457
        %v459 = vpop.f32.mrb[0].mxu0
        %460 = vmatprep.mubr.f32.mxu0 0.0
        %461 = vmatmul.mubr.f32.gmra.mrb[0].mxu0 %v379
        %v462 = vpop.f32.mrb[0].mxu0
        %v463 = vadd.f32 0.0, %v462
        %v464 = vpop.f32.mrb[0].mxu0
        %465 = vdwg.mxu0
        %v466 = vld [vmem:[%s4] sm:$0xff]
        %v467 = vld [vmem:[%s4 + $0x8] sm:$0xff]
        %v468 = vld [vmem:[%s4 + $0x10] sm:$0xff]
        %v469 = vld [vmem:[%s4 + $0x18] sm:$0xff]
        %v470 = vld [vmem:[%s4 + $0x20] sm:$0xff]
        %v471 = vld [vmem:[%s4 + $0x28] sm:$0xff]
        %v472 = vld [vmem:[%s4 + $0x30] sm:$0xff]
        %v473 = vld [vmem:[%s4 + $0x38] sm:$0xff]
        %vm474 = vcmask 261120
        %v476 = vsel %vm474, %v466, 0
        %v479 = vsel %vm474, %v467, 0
        %v482 = vsel %vm474, %v468, 0
        %v485 = vsel %vm474, %v469, 0
        %v488 = vsel %vm474, %v470, 0
        %v491 = vsel %vm474, %v471, 0
        %v494 = vsel %vm474, %v472, 0
        %v497 = vsel %vm474, %v473, 0
        %499 = vmatprep.subr.mxu0 0.0
        %500 = vmatpush1.msra.mxu0 %v448
        %501 = vmatprep.subr.mxu0 0.0
        %502 = vmatpush1.msra.mxu0 %v453
        %503 = vmatprep.subr.mxu0 0.0
        %504 = vmatpush1.msra.mxu0 %v458
        %505 = vmatprep.subr.mxu0 0.0
        %506 = vmatpush1.msra.mxu0 %v463
        %507 = vmatprep.subr.mxu0 0.0
        %508 = vmatpush1.msra.mxu0 0.0
        %509 = vmatprep.subr.mxu0 0.0
        %510 = vmatpush1.msra.mxu0 0.0
        %511 = vmatprep.subr.mxu0 0.0
        %512 = vmatpush1.msra.mxu0 0.0
        %513 = vmatprep.subr.mxu0 0.0
        %514 = vmatpush1.msra.mxu0 0.0
        %515 = vmatprep.subr.mxu0 0.0
        %516 = vmatpush1.msra.mxu0 0.0
        %517 = vmatprep.subr.mxu0 0.0
        %518 = vmatpush1.msra.mxu0 0.0
        %519 = vmatprep.subr.mxu0 0.0
        %520 = vmatpush1.msra.mxu0 0.0
        %521 = vmatprep.subr.mxu0 0.0
        %522 = vmatpush1.msra.mxu0 0.0
        %523 = vmatprep.subr.mxu0 0.0
        %524 = vmatpush1.msra.mxu0 0.0
        %525 = vmatprep.subr.mxu0 0.0
        %526 = vmatpush1.msra.mxu0 0.0
        %527 = vmatprep.subr.mxu0 0.0
        %528 = vmatpush1.msra.mxu0 0.0
        %529 = vmatprep.subr.mxu0 0.0
        %530 = vmatpush1.msra.mxu0 0.0
        %531 = vmatprep.subr.mxu0 0.0
        %532 = vmatpush1.msra.mxu0 0.0
        %533 = vmatprep.subr.mxu0 0.0
        %534 = vmatpush1.msra.mxu0 0.0
        %535 = vmatprep.subr.mxu0 0.0
        %536 = vmatpush1.msra.mxu0 0.0
        %537 = vmatprep.subr.mxu0 0.0
        %538 = vmatpush1.msra.mxu0 0.0
        %539 = vmatprep.subr.mxu0 0.0
        %540 = vmatpush1.msra.mxu0 0.0
        %541 = vmatprep.subr.mxu0 0.0
        %542 = vmatpush1.msra.mxu0 0.0
        %543 = vmatprep.subr.mxu0 0.0
        %544 = vmatpush1.msra.mxu0 0.0
        %545 = vmatprep.subr.mxu0 0.0
        %546 = vmatpush1.msra.mxu0 0.0
        %547 = vmatprep.subr.mxu0 0.0
        %548 = vmatpush1.msra.mxu0 0.0
        %549 = vmatprep.subr.mxu0 0.0
        %550 = vmatpush1.msra.mxu0 0.0
        %551 = vmatprep.subr.mxu0 0.0
        %552 = vmatpush1.msra.mxu0 0.0
        %553 = vmatprep.subr.mxu0 0.0
        %554 = vmatpush1.msra.mxu0 0.0
        %555 = vmatprep.subr.mxu0 0.0
        %556 = vmatpush1.msra.mxu0 0.0
        %557 = vmatprep.subr.mxu0 0.0
        %558 = vmatpush1.msra.mxu0 0.0
        %559 = vmatprep.subr.mxu0 0.0
        %560 = vmatpush1.msra.mxu0 0.0
        %561 = vmatprep.subr.mxu0 0.0
        %562 = vmatpush1.msra.mxu0 0.0
        %563 = vmatprep.mubr.f32.mxu0 0.0
        %564 = vmatmul.mubr.f32.gmra.mrb[0].mxu0 %v476
        %v565 = vpop.f32.mrb[0].mxu0
        %v566 = vadd.f32 0.0, %v565
        %v567 = vpop.f32.mrb[0].mxu0
        %568 = vmatprep.mubr.f32.mxu0 0.0
        %569 = vmatmul.mubr.f32.gmra.mrb[0].mxu0 %v479
        %v570 = vpop.f32.mrb[0].mxu0
        %v571 = vadd.f32 0.0, %v570
        %v572 = vpop.f32.mrb[0].mxu0
        %573 = vmatprep.mubr.f32.mxu0 0.0
        %574 = vmatmul.mubr.f32.gmra.mrb[0].mxu0 %v482
        %v575 = vpop.f32.mrb[0].mxu0
        %v576 = vadd.f32 0.0, %v575
        %v577 = vpop.f32.mrb[0].mxu0
        %578 = vmatprep.mubr.f32.mxu0 0.0
        %579 = vmatmul.mubr.f32.gmra.mrb[0].mxu0 %v485
        %v580 = vpop.f32.mrb[0].mxu0
        %v581 = vadd.f32 0.0, %v580
        %v582 = vpop.f32.mrb[0].mxu0
        %583 = vmatprep.mubr.f32.mxu0 0.0
        %584 = vmatmul.mubr.f32.gmra.mrb[0].mxu0 %v488
        %v585 = vpop.f32.mrb[0].mxu0
        %v586 = vadd.f32 0.0, %v585
        %v587 = vpop.f32.mrb[0].mxu0
        %588 = vmatprep.mubr.f32.mxu0 0.0
        %589 = vmatmul.mubr.f32.gmra.mrb[0].mxu0 %v491
        %v590 = vpop.f32.mrb[0].mxu0
        %v591 = vadd.f32 0.0, %v590
        %v592 = vpop.f32.mrb[0].mxu0
        %593 = vmatprep.mubr.f32.mxu0 0.0
        %594 = vmatmul.mubr.f32.gmra.mrb[0].mxu0 %v494
        %v595 = vpop.f32.mrb[0].mxu0
        %v596 = vadd.f32 0.0, %v595
        %v597 = vpop.f32.mrb[0].mxu0
        %598 = vmatprep.mubr.f32.mxu0 0.0
        %599 = vmatmul.mubr.f32.gmra.mrb[0].mxu0 %v497
        %v600 = vpop.f32.mrb[0].mxu0
        %v601 = vadd.f32 0.0, %v600
        %v602 = vpop.f32.mrb[0].mxu0
        %603 = vdwg.mxu0
        %v604 = vmul.f32 %v566, 0.0078125
        %v605 = vmul.f32 %v571, 0.0078125
        %v606 = vmul.f32 %v576, 0.0078125
        %v607 = vmul.f32 %v581, 0.0078125
        %v608 = vmul.f32 %v586, 0.0078125
        %v609 = vmul.f32 %v591, 0.0078125
        %v610 = vmul.f32 %v596, 0.0078125
        %v611 = vmul.f32 %v601, 0.0078125
        %613 = vset.pattern.permute.xlu0 0
        %614 = vperm.xlu0 %613, %v604
        %v615 = vpop.permute.xlu0 %614
        %618 = vset.pattern.permute.xlu0 0
        %619 = vperm.xlu0 %618, %v605
        %v620 = vpop.permute.xlu0 %619
        %623 = vset.pattern.permute.xlu0 0
        %624 = vperm.xlu0 %623, %v606
        %v625 = vpop.permute.xlu0 %624
        %628 = vset.pattern.permute.xlu0 0
        %629 = vperm.xlu0 %628, %v607
        %v630 = vpop.permute.xlu0 %629
        %633 = vset.pattern.permute.xlu0 0
        %634 = vperm.xlu0 %633, %v608
        %v635 = vpop.permute.xlu0 %634
        %638 = vset.pattern.permute.xlu0 0
        %639 = vperm.xlu0 %638, %v609
        %v640 = vpop.permute.xlu0 %639
        %643 = vset.pattern.permute.xlu0 0
        %644 = vperm.xlu0 %643, %v610
        %v645 = vpop.permute.xlu0 %644
        %648 = vset.pattern.permute.xlu0 0
        %649 = vperm.xlu0 %648, %v611
        %v650 = vpop.permute.xlu0 %649
        %v652 = vsub.f32 %v332, %v615
        %v653 = vsub.f32 %v333, %v620
        %v654 = vsub.f32 %v334, %v625
        %v655 = vsub.f32 %v335, %v630
        %v656 = vsub.f32 %v336, %v635
        %v657 = vsub.f32 %v337, %v640
        %v658 = vsub.f32 %v338, %v645
        %v659 = vsub.f32 %v339, %v650
        %v660 = vmul.f32 %v652, %v652
        %v661 = vmul.f32 %v653, %v653
        %v662 = vmul.f32 %v654, %v654
        %v663 = vmul.f32 %v655, %v655
        %v664 = vmul.f32 %v656, %v656
        %v665 = vmul.f32 %v657, %v657
        %v666 = vmul.f32 %v658, %v658
        %v667 = vmul.f32 %v659, %v659
        %v668 = vsel %vm340, %v660, 0.0
        %669 = vadd.xlane.f32.xlu0 %v668
        %v670 = vpop.xlane.xlu0 %669
        %v671 = vsel %vm340, %v661, 0.0
        %672 = vadd.xlane.f32.xlu0 %v671
        %v673 = vpop.xlane.xlu0 %672
        %v674 = vsel %vm340, %v662, 0.0
        %675 = vadd.xlane.f32.xlu0 %v674
        %v676 = vpop.xlane.xlu0 %675
        %v677 = vsel %vm340, %v663, 0.0
        %678 = vadd.xlane.f32.xlu0 %v677
        %v679 = vpop.xlane.xlu0 %678
        %v680 = vsel %vm340, %v664, 0.0
        %681 = vadd.xlane.f32.xlu0 %v680
        %v682 = vpop.xlane.xlu0 %681
        %v683 = vsel %vm340, %v665, 0.0
        %684 = vadd.xlane.f32.xlu0 %v683
        %v685 = vpop.xlane.xlu0 %684
        %v686 = vsel %vm340, %v666, 0.0
        %687 = vadd.xlane.f32.xlu0 %v686
        %v688 = vpop.xlane.xlu0 %687
        %v689 = vsel %vm340, %v667, 0.0
        %690 = vadd.xlane.f32.xlu0 %v689
        %v691 = vpop.xlane.xlu0 %690
        %692 = vmatprep.subr.mxu0 0.0
        %693 = vmatpush1.msra.mxu0 %v670
        %694 = vmatprep.subr.mxu0 0.0
        %695 = vmatpush1.msra.mxu0 %v673
        %696 = vmatprep.subr.mxu0 0.0
        %697 = vmatpush1.msra.mxu0 %v676
        %698 = vmatprep.subr.mxu0 0.0
        %699 = vmatpush1.msra.mxu0 %v679
        %700 = vmatprep.subr.mxu0 0.0
        %701 = vmatpush1.msra.mxu0 %v682
        %702 = vmatprep.subr.mxu0 0.0
        %703 = vmatpush1.msra.mxu0 %v685
        %704 = vmatprep.subr.mxu0 0.0
        %705 = vmatpush1.msra.mxu0 %v688
        %706 = vmatprep.subr.mxu0 0.0
        %707 = vmatpush1.msra.mxu0 %v691
        %708 = vmatprep.subr.mxu0 0.0
        %709 = vmatpush1.msra.mxu0 0.0
        %710 = vmatprep.subr.mxu0 0.0
        %711 = vmatpush1.msra.mxu0 0.0
        %712 = vmatprep.subr.mxu0 0.0
        %713 = vmatpush1.msra.mxu0 0.0
        %714 = vmatprep.subr.mxu0 0.0
        %715 = vmatpush1.msra.mxu0 0.0
        %716 = vmatprep.subr.mxu0 0.0
        %717 = vmatpush1.msra.mxu0 0.0
        %718 = vmatprep.subr.mxu0 0.0
        %719 = vmatpush1.msra.mxu0 0.0
        %720 = vmatprep.subr.mxu0 0.0
        %721 = vmatpush1.msra.mxu0 0.0
        %722 = vmatprep.subr.mxu0 0.0
        %723 = vmatpush1.msra.mxu0 0.0
        %724 = vmatprep.subr.mxu0 0.0
        %725 = vmatpush1.msra.mxu0 0.0
        %726 = vmatprep.subr.mxu0 0.0
        %727 = vmatpush1.msra.mxu0 0.0
        %728 = vmatprep.subr.mxu0 0.0
        %729 = vmatpush1.msra.mxu0 0.0
        %730 = vmatprep.subr.mxu0 0.0
        %731 = vmatpush1.msra.mxu0 0.0
        %732 = vmatprep.subr.mxu0 0.0
        %733 = vmatpush1.msra.mxu0 0.0
        %734 = vmatprep.subr.mxu0 0.0
        %735 = vmatpush1.msra.mxu0 0.0
        %736 = vmatprep.subr.mxu0 0.0
        %737 = vmatpush1.msra.mxu0 0.0
        %738 = vmatprep.subr.mxu0 0.0
        %739 = vmatpush1.msra.mxu0 0.0
        %740 = vmatprep.subr.mxu0 0.0
        %741 = vmatpush1.msra.mxu0 0.0
        %742 = vmatprep.subr.mxu0 0.0
        %743 = vmatpush1.msra.mxu0 0.0
        %744 = vmatprep.subr.mxu0 0.0
        %745 = vmatpush1.msra.mxu0 0.0
        %746 = vmatprep.subr.mxu0 0.0
        %747 = vmatpush1.msra.mxu0 0.0
        %748 = vmatprep.subr.mxu0 0.0
        %749 = vmatpush1.msra.mxu0 0.0
        %750 = vmatprep.subr.mxu0 0.0
        %751 = vmatpush1.msra.mxu0 0.0
        %752 = vmatprep.subr.mxu0 0.0
        %753 = vmatpush1.msra.mxu0 0.0
        %754 = vmatprep.subr.mxu0 0.0
        %755 = vmatpush1.msra.mxu0 0.0
        %756 = vmatprep.mubr.f32.mxu0 0.0
        %757 = vmatmul.mubr.f32.gmra.mrb[0].mxu0 %v370
        %v758 = vpop.f32.mrb[0].mxu0
        %v759 = vadd.f32 0.0, %v758
        %v760 = vpop.f32.mrb[0].mxu0
        %761 = vmatprep.mubr.f32.mxu0 0.0
        %762 = vmatmul.mubr.f32.gmra.mrb[0].mxu0 %v373
        %v763 = vpop.f32.mrb[0].mxu0
        %v764 = vadd.f32 0.0, %v763
        %v765 = vpop.f32.mrb[0].mxu0
        %766 = vmatprep.mubr.f32.mxu0 0.0
        %767 = vmatmul.mubr.f32.gmra.mrb[0].mxu0 %v376
        %v768 = vpop.f32.mrb[0].mxu0
        %v769 = vadd.f32 0.0, %v768
        %v770 = vpop.f32.mrb[0].mxu0
        %771 = vmatprep.mubr.f32.mxu0 0.0
        %772 = vmatmul.mubr.f32.gmra.mrb[0].mxu0 %v379
        %v773 = vpop.f32.mrb[0].mxu0
        %v774 = vadd.f32 0.0, %v773
        %v775 = vpop.f32.mrb[0].mxu0
        %776 = vdwg.mxu0
        %777 = vmatprep.subr.mxu0 0.0
        %778 = vmatpush1.msra.mxu0 %v759
        %779 = vmatprep.subr.mxu0 0.0
        %780 = vmatpush1.msra.mxu0 %v764
        %781 = vmatprep.subr.mxu0 0.0
        %782 = vmatpush1.msra.mxu0 %v769
        %783 = vmatprep.subr.mxu0 0.0
        %784 = vmatpush1.msra.mxu0 %v774
        %785 = vmatprep.subr.mxu0 0.0
        %786 = vmatpush1.msra.mxu0 0.0
        %787 = vmatprep.subr.mxu0 0.0
        %788 = vmatpush1.msra.mxu0 0.0
        %789 = vmatprep.subr.mxu0 0.0
        %790 = vmatpush1.msra.mxu0 0.0
        %791 = vmatprep.subr.mxu0 0.0
        %792 = vmatpush1.msra.mxu0 0.0
        %793 = vmatprep.subr.mxu0 0.0
        %794 = vmatpush1.msra.mxu0 0.0
        %795 = vmatprep.subr.mxu0 0.0
        %796 = vmatpush1.msra.mxu0 0.0
        %797 = vmatprep.subr.mxu0 0.0
        %798 = vmatpush1.msra.mxu0 0.0
        %799 = vmatprep.subr.mxu0 0.0
        %800 = vmatpush1.msra.mxu0 0.0
        %801 = vmatprep.subr.mxu0 0.0
        %802 = vmatpush1.msra.mxu0 0.0
        %803 = vmatprep.subr.mxu0 0.0
        %804 = vmatpush1.msra.mxu0 0.0
        %805 = vmatprep.subr.mxu0 0.0
        %806 = vmatpush1.msra.mxu0 0.0
        %807 = vmatprep.subr.mxu0 0.0
        %808 = vmatpush1.msra.mxu0 0.0
        %809 = vmatprep.subr.mxu0 0.0
        %810 = vmatpush1.msra.mxu0 0.0
        %811 = vmatprep.subr.mxu0 0.0
        %812 = vmatpush1.msra.mxu0 0.0
        %813 = vmatprep.subr.mxu0 0.0
        %814 = vmatpush1.msra.mxu0 0.0
        %815 = vmatprep.subr.mxu0 0.0
        %816 = vmatpush1.msra.mxu0 0.0
        %817 = vmatprep.subr.mxu0 0.0
        %818 = vmatpush1.msra.mxu0 0.0
        %819 = vmatprep.subr.mxu0 0.0
        %820 = vmatpush1.msra.mxu0 0.0
        %821 = vmatprep.subr.mxu0 0.0
        %822 = vmatpush1.msra.mxu0 0.0
        %823 = vmatprep.subr.mxu0 0.0
        %824 = vmatpush1.msra.mxu0 0.0
        %825 = vmatprep.subr.mxu0 0.0
        %826 = vmatpush1.msra.mxu0 0.0
        %827 = vmatprep.subr.mxu0 0.0
        %828 = vmatpush1.msra.mxu0 0.0
        %829 = vmatprep.subr.mxu0 0.0
        %830 = vmatpush1.msra.mxu0 0.0
        %831 = vmatprep.subr.mxu0 0.0
        %832 = vmatpush1.msra.mxu0 0.0
        %833 = vmatprep.subr.mxu0 0.0
        %834 = vmatpush1.msra.mxu0 0.0
        %835 = vmatprep.subr.mxu0 0.0
        %836 = vmatpush1.msra.mxu0 0.0
        %837 = vmatprep.subr.mxu0 0.0
        %838 = vmatpush1.msra.mxu0 0.0
        %839 = vmatprep.subr.mxu0 0.0
        %840 = vmatpush1.msra.mxu0 0.0
        %841 = vmatprep.mubr.f32.mxu0 0.0
        %842 = vmatmul.mubr.f32.gmra.mrb[0].mxu0 %v476
        %v843 = vpop.f32.mrb[0].mxu0
        %v844 = vadd.f32 0.0, %v843
        %v845 = vpop.f32.mrb[0].mxu0
        %846 = vmatprep.mubr.f32.mxu0 0.0
        %847 = vmatmul.mubr.f32.gmra.mrb[0].mxu0 %v479
        %v848 = vpop.f32.mrb[0].mxu0
        %v849 = vadd.f32 0.0, %v848
        %v850 = vpop.f32.mrb[0].mxu0
        %851 = vmatprep.mubr.f32.mxu0 0.0
        %852 = vmatmul.mubr.f32.gmra.mrb[0].mxu0 %v482
        %v853 = vpop.f32.mrb[0].mxu0
        %v854 = vadd.f32 0.0, %v853
        %v855 = vpop.f32.mrb[0].mxu0
        %856 = vmatprep.mubr.f32.mxu0 0.0
        %857 = vmatmul.mubr.f32.gmra.mrb[0].mxu0 %v485
        %v858 = vpop.f32.mrb[0].mxu0
        %v859 = vadd.f32 0.0, %v858
        %v860 = vpop.f32.mrb[0].mxu0
        %861 = vmatprep.mubr.f32.mxu0 0.0
        %862 = vmatmul.mubr.f32.gmra.mrb[0].mxu0 %v488
        %v863 = vpop.f32.mrb[0].mxu0
        %v864 = vadd.f32 0.0, %v863
        %v865 = vpop.f32.mrb[0].mxu0
        %866 = vmatprep.mubr.f32.mxu0 0.0
        %867 = vmatmul.mubr.f32.gmra.mrb[0].mxu0 %v491
        %v868 = vpop.f32.mrb[0].mxu0
        %v869 = vadd.f32 0.0, %v868
        %v870 = vpop.f32.mrb[0].mxu0
        %871 = vmatprep.mubr.f32.mxu0 0.0
        %872 = vmatmul.mubr.f32.gmra.mrb[0].mxu0 %v494
        %v873 = vpop.f32.mrb[0].mxu0
        %v874 = vadd.f32 0.0, %v873
        %v875 = vpop.f32.mrb[0].mxu0
        %876 = vmatprep.mubr.f32.mxu0 0.0
        %877 = vmatmul.mubr.f32.gmra.mrb[0].mxu0 %v497
        %v878 = vpop.f32.mrb[0].mxu0
        %v879 = vadd.f32 0.0, %v878
        %v880 = vpop.f32.mrb[0].mxu0
        %881 = vdwg.mxu0
        %v882 = vmul.f32 %v844, 0.0078125
        %v883 = vmul.f32 %v849, 0.0078125
        %v884 = vmul.f32 %v854, 0.0078125
        %v885 = vmul.f32 %v859, 0.0078125
        %v886 = vmul.f32 %v864, 0.0078125
        %v887 = vmul.f32 %v869, 0.0078125
        %v888 = vmul.f32 %v874, 0.0078125
        %v889 = vmul.f32 %v879, 0.0078125
        %v890 = vadd.f32 %v882, 1e-05
        %v891 = vadd.f32 %v883, 1e-05
        %v892 = vadd.f32 %v884, 1e-05
        %v893 = vadd.f32 %v885, 1e-05
        %v894 = vadd.f32 %v886, 1e-05
        %v895 = vadd.f32 %v887, 1e-05
        %v896 = vadd.f32 %v888, 1e-05
        %v897 = vadd.f32 %v889, 1e-05
        %v898 = vrsqrt.pop %v890
        %v899 = vrsqrt.pop %v891
        %v900 = vrsqrt.pop %v892
        %v901 = vrsqrt.pop %v893
        %v902 = vrsqrt.pop %v894
        %v903 = vrsqrt.pop %v895
        %v904 = vrsqrt.pop %v896
        %v905 = vrsqrt.pop %v897
        %907 = vset.pattern.permute.xlu0 0
        %908 = vperm.xlu0 %907, %v898
        %v909 = vpop.permute.xlu0 %908
        %912 = vset.pattern.permute.xlu0 0
        %913 = vperm.xlu0 %912, %v899
        %v914 = vpop.permute.xlu0 %913
        %917 = vset.pattern.permute.xlu0 0
        %918 = vperm.xlu0 %917, %v900
        %v919 = vpop.permute.xlu0 %918
        %922 = vset.pattern.permute.xlu0 0
        %923 = vperm.xlu0 %922, %v901
        %v924 = vpop.permute.xlu0 %923
        %927 = vset.pattern.permute.xlu0 0
        %928 = vperm.xlu0 %927, %v902
        %v929 = vpop.permute.xlu0 %928
        %932 = vset.pattern.permute.xlu0 0
        %933 = vperm.xlu0 %932, %v903
        %v934 = vpop.permute.xlu0 %933
        %937 = vset.pattern.permute.xlu0 0
        %938 = vperm.xlu0 %937, %v904
        %v939 = vpop.permute.xlu0 %938
        %942 = vset.pattern.permute.xlu0 0
        %943 = vperm.xlu0 %942, %v905
        %v944 = vpop.permute.xlu0 %943
        %v946 = vmul.f32 %v652, %v909
        %v947 = vmul.f32 %v653, %v914
        %v948 = vmul.f32 %v654, %v919
        %v949 = vmul.f32 %v655, %v924
        %v950 = vmul.f32 %v656, %v929
        %v951 = vmul.f32 %v657, %v934
        %v952 = vmul.f32 %v658, %v939
        %v953 = vmul.f32 %v659, %v944
        %v954 = vld [vmem:[%s1] sm:$0xff]
        %v955 = vld [vmem:[%s1 + $0x8] sm:$0xff]
        %v956 = vld [vmem:[%s1 + $0x10] sm:$0xff]
        %v957 = vld [vmem:[%s1 + $0x18] sm:$0xff]
        %v958 = vld [vmem:[%s1 + $0x20] sm:$0xff]
        %v959 = vld [vmem:[%s1 + $0x28] sm:$0xff]
        %v960 = vld [vmem:[%s1 + $0x30] sm:$0xff]
        %v961 = vld [vmem:[%s1 + $0x38] sm:$0xff]
        %963 = vset.pattern.permute.xlu0 0
        %964 = vperm.xlu0 %963, %v954
        %v965 = vpop.permute.xlu0 %964
        %968 = vset.pattern.permute.xlu0 0
        %969 = vperm.xlu0 %968, %v955
        %v970 = vpop.permute.xlu0 %969
        %973 = vset.pattern.permute.xlu0 0
        %974 = vperm.xlu0 %973, %v956
        %v975 = vpop.permute.xlu0 %974
        %978 = vset.pattern.permute.xlu0 0
        %979 = vperm.xlu0 %978, %v957
        %v980 = vpop.permute.xlu0 %979
        %983 = vset.pattern.permute.xlu0 0
        %984 = vperm.xlu0 %983, %v958
        %v985 = vpop.permute.xlu0 %984
        %988 = vset.pattern.permute.xlu0 0
        %989 = vperm.xlu0 %988, %v959
        %v990 = vpop.permute.xlu0 %989
        %993 = vset.pattern.permute.xlu0 0
        %994 = vperm.xlu0 %993, %v960
        %v995 = vpop.permute.xlu0 %994
        %998 = vset.pattern.permute.xlu0 0
        %999 = vperm.xlu0 %998, %v961
        %v1000 = vpop.permute.xlu0 %999
        %v1002 = vmul.f32 %v946, %v965
        %v1003 = vmul.f32 %v947, %v970
        %v1004 = vmul.f32 %v948, %v975
        %v1005 = vmul.f32 %v949, %v980
        %v1006 = vmul.f32 %v950, %v985
        %v1007 = vmul.f32 %v951, %v990
        %v1008 = vmul.f32 %v952, %v995
        %v1009 = vmul.f32 %v953, %v1000
        %v1010 = vld [vmem:[%s2] sm:$0xff]
        %v1011 = vld [vmem:[%s2 + $0x8] sm:$0xff]
        %v1012 = vld [vmem:[%s2 + $0x10] sm:$0xff]
        %v1013 = vld [vmem:[%s2 + $0x18] sm:$0xff]
        %v1014 = vld [vmem:[%s2 + $0x20] sm:$0xff]
        %v1015 = vld [vmem:[%s2 + $0x28] sm:$0xff]
        %v1016 = vld [vmem:[%s2 + $0x30] sm:$0xff]
        %v1017 = vld [vmem:[%s2 + $0x38] sm:$0xff]
        %1019 = vset.pattern.permute.xlu0 0
        %1020 = vperm.xlu0 %1019, %v1010
        %v1021 = vpop.permute.xlu0 %1020
        %1024 = vset.pattern.permute.xlu0 0
        %1025 = vperm.xlu0 %1024, %v1011
        %v1026 = vpop.permute.xlu0 %1025
        %1029 = vset.pattern.permute.xlu0 0
        %1030 = vperm.xlu0 %1029, %v1012
        %v1031 = vpop.permute.xlu0 %1030
        %1034 = vset.pattern.permute.xlu0 0
        %1035 = vperm.xlu0 %1034, %v1013
        %v1036 = vpop.permute.xlu0 %1035
        %1039 = vset.pattern.permute.xlu0 0
        %1040 = vperm.xlu0 %1039, %v1014
        %v1041 = vpop.permute.xlu0 %1040
        %1044 = vset.pattern.permute.xlu0 0
        %1045 = vperm.xlu0 %1044, %v1015
        %v1046 = vpop.permute.xlu0 %1045
        %1049 = vset.pattern.permute.xlu0 0
        %1050 = vperm.xlu0 %1049, %v1016
        %v1051 = vpop.permute.xlu0 %1050
        %1054 = vset.pattern.permute.xlu0 0
        %1055 = vperm.xlu0 %1054, %v1017
        %v1056 = vpop.permute.xlu0 %1055
        %v1058 = vadd.f32 %v1002, %v1021
        %v1059 = vadd.f32 %v1003, %v1026
        %v1060 = vadd.f32 %v1004, %v1031
        %v1061 = vadd.f32 %v1005, %v1036
        %v1062 = vadd.f32 %v1006, %v1041
        %v1063 = vadd.f32 %v1007, %v1046
        %v1064 = vadd.f32 %v1008, %v1051
        %v1065 = vadd.f32 %v1009, %v1056
        %v1066 = vld [vmem:[%s5] sm:$0xf]
        %v1067 = vld [vmem:[%s5 + $0x4] sm:$0xf]
        %v1068 = vld [vmem:[%s5 + $0x8] sm:$0xf]
        %v1069 = vld [vmem:[%s5 + $0xc] sm:$0xf]
        %v1070 = vld [vmem:[%s5 + $0x10] sm:$0xf]
        %v1071 = vld [vmem:[%s5 + $0x14] sm:$0xf]
        %v1072 = vld [vmem:[%s5 + $0x18] sm:$0xf]
        %v1073 = vld [vmem:[%s5 + $0x1c] sm:$0xf]
        %v1074 = vld [vmem:[%s5 + $0x20] sm:$0xf]
        %v1075 = vld [vmem:[%s5 + $0x24] sm:$0xf]
        %v1076 = vld [vmem:[%s5 + $0x28] sm:$0xf]
        %v1077 = vld [vmem:[%s5 + $0x2c] sm:$0xf]
        %v1078 = vld [vmem:[%s5 + $0x30] sm:$0xf]
        %v1079 = vld [vmem:[%s5 + $0x34] sm:$0xf]
        %v1080 = vld [vmem:[%s5 + $0x38] sm:$0xf]
        %v1081 = vld [vmem:[%s5 + $0x3c] sm:$0xf]
        %v1082 = vld [vmem:[%s5 + $0x40] sm:$0xf]
        %v1083 = vld [vmem:[%s5 + $0x44] sm:$0xf]
        %v1084 = vld [vmem:[%s5 + $0x48] sm:$0xf]
        %v1085 = vld [vmem:[%s5 + $0x4c] sm:$0xf]
        %v1086 = vld [vmem:[%s5 + $0x50] sm:$0xf]
        %v1087 = vld [vmem:[%s5 + $0x54] sm:$0xf]
        %v1088 = vld [vmem:[%s5 + $0x58] sm:$0xf]
        %v1089 = vld [vmem:[%s5 + $0x5c] sm:$0xf]
        %v1090 = vpack.c.bf16 %v1059, %v1058
        %v1091 = vpack.c.bf16 %v1061, %v1060
        %v1092 = vpack.c.bf16 %v1063, %v1062
        %v1093 = vpack.c.bf16 %v1065, %v1064
        %v1094 = vld [vmem:[%s6] sm:$0xff]
        %v1095 = vld [vmem:[%s6 + $0x8] sm:$0xff]
        %v1096 = vld [vmem:[%s6 + $0x10] sm:$0xff]
        %v1097 = vld [vmem:[%s6 + $0x18] sm:$0xff]
        %v1098 = vld [vmem:[%s6 + $0x20] sm:$0xff]
        %v1099 = vld [vmem:[%s6 + $0x28] sm:$0xff]
        %v1100 = vld [vmem:[%s6 + $0x30] sm:$0xff]
        %v1101 = vld [vmem:[%s6 + $0x38] sm:$0xff]
        %v1102 = vld [vmem:[%s6 + $0x40] sm:$0xff]
        %v1103 = vld [vmem:[%s6 + $0x48] sm:$0xff]
        %v1104 = vld [vmem:[%s6 + $0x50] sm:$0xff]
        %v1105 = vld [vmem:[%s6 + $0x58] sm:$0xff]
        %v1106 = vld [vmem:[%s6 + $0x60] sm:$0xff]
        %v1107 = vld [vmem:[%s6 + $0x68] sm:$0xff]
        %v1108 = vld [vmem:[%s6 + $0x70] sm:$0xff]
        %v1109 = vld [vmem:[%s6 + $0x78] sm:$0xff]
        %v1110 = vld [vmem:[%s6 + $0x80] sm:$0xff]
        %v1111 = vld [vmem:[%s6 + $0x88] sm:$0xff]
        %v1112 = vld [vmem:[%s6 + $0x90] sm:$0xff]
        %v1113 = vld [vmem:[%s6 + $0x98] sm:$0xff]
        %v1114 = vld [vmem:[%s6 + $0xa0] sm:$0xff]
        %v1115 = vld [vmem:[%s6 + $0xa8] sm:$0xff]
        %v1116 = vld [vmem:[%s6 + $0xb0] sm:$0xff]
        %v1117 = vld [vmem:[%s6 + $0xb8] sm:$0xff]
        %1119 = vset.pattern.permute.xlu0 0
        %1120 = vperm.xlu0 %1119, %v1094
        %v1121 = vpop.permute.xlu0 %1120
        %1124 = vset.pattern.permute.xlu0 0
        %1125 = vperm.xlu0 %1124, %v1095
        %v1126 = vpop.permute.xlu0 %1125
        %1129 = vset.pattern.permute.xlu0 0
        %1130 = vperm.xlu0 %1129, %v1096
        %v1131 = vpop.permute.xlu0 %1130
        %1134 = vset.pattern.permute.xlu0 0
        %1135 = vperm.xlu0 %1134, %v1097
        %v1136 = vpop.permute.xlu0 %1135
        %1139 = vset.pattern.permute.xlu0 0
        %1140 = vperm.xlu0 %1139, %v1098
        %v1141 = vpop.permute.xlu0 %1140
        %1144 = vset.pattern.permute.xlu0 0
        %1145 = vperm.xlu0 %1144, %v1099
        %v1146 = vpop.permute.xlu0 %1145
        %1149 = vset.pattern.permute.xlu0 0
        %1150 = vperm.xlu0 %1149, %v1100
        %v1151 = vpop.permute.xlu0 %1150
        %1154 = vset.pattern.permute.xlu0 0
        %1155 = vperm.xlu0 %1154, %v1101
        %v1156 = vpop.permute.xlu0 %1155
        %1159 = vset.pattern.permute.xlu0 0
        %1160 = vperm.xlu0 %1159, %v1102
        %v1161 = vpop.permute.xlu0 %1160
        %1164 = vset.pattern.permute.xlu0 0
        %1165 = vperm.xlu0 %1164, %v1103
        %v1166 = vpop.permute.xlu0 %1165
        %1169 = vset.pattern.permute.xlu0 0
        %1170 = vperm.xlu0 %1169, %v1104
        %v1171 = vpop.permute.xlu0 %1170
        %1174 = vset.pattern.permute.xlu0 0
        %1175 = vperm.xlu0 %1174, %v1105
        %v1176 = vpop.permute.xlu0 %1175
        %1179 = vset.pattern.permute.xlu0 0
        %1180 = vperm.xlu0 %1179, %v1106
        %v1181 = vpop.permute.xlu0 %1180
        %1184 = vset.pattern.permute.xlu0 0
        %1185 = vperm.xlu0 %1184, %v1107
        %v1186 = vpop.permute.xlu0 %1185
        %1189 = vset.pattern.permute.xlu0 0
        %1190 = vperm.xlu0 %1189, %v1108
        %v1191 = vpop.permute.xlu0 %1190
        %1194 = vset.pattern.permute.xlu0 0
        %1195 = vperm.xlu0 %1194, %v1109
        %v1196 = vpop.permute.xlu0 %1195
        %1199 = vset.pattern.permute.xlu0 0
        %1200 = vperm.xlu0 %1199, %v1110
        %v1201 = vpop.permute.xlu0 %1200
        %1204 = vset.pattern.permute.xlu0 0
        %1205 = vperm.xlu0 %1204, %v1111
        %v1206 = vpop.permute.xlu0 %1205
        %1209 = vset.pattern.permute.xlu0 0
        %1210 = vperm.xlu0 %1209, %v1112
        %v1211 = vpop.permute.xlu0 %1210
        %1214 = vset.pattern.permute.xlu0 0
        %1215 = vperm.xlu0 %1214, %v1113
        %v1216 = vpop.permute.xlu0 %1215
        %1219 = vset.pattern.permute.xlu0 0
        %1220 = vperm.xlu0 %1219, %v1114
        %v1221 = vpop.permute.xlu0 %1220
        %1224 = vset.pattern.permute.xlu0 0
        %1225 = vperm.xlu0 %1224, %v1115
        %v1226 = vpop.permute.xlu0 %1225
        %1229 = vset.pattern.permute.xlu0 0
        %1230 = vperm.xlu0 %1229, %v1116
        %v1231 = vpop.permute.xlu0 %1230
        %1234 = vset.pattern.permute.xlu0 0
        %1235 = vperm.xlu0 %1234, %v1117
        %v1236 = vpop.permute.xlu0 %1235
        %v1262 = vunpack.c.l.b16 %v1066
        %v1263 = vunpack.c.l.b16 %v1067
        %v1264 = vunpack.c.l.b16 %v1068
        %v1265 = vunpack.c.l.b16 %v1069
        %v1266 = vunpack.c.l.b16 %v1070
        %v1267 = vunpack.c.l.b16 %v1071
        %v1268 = vunpack.c.l.b16 %v1072
        %v1269 = vunpack.c.l.b16 %v1073
        %v1270 = vunpack.c.l.b16 %v1074
        %v1271 = vunpack.c.l.b16 %v1075
        %v1272 = vunpack.c.l.b16 %v1076
        %v1273 = vunpack.c.l.b16 %v1077
        %v1274 = vunpack.c.l.b16 %v1078
        %v1275 = vunpack.c.l.b16 %v1079
        %v1276 = vunpack.c.l.b16 %v1080
        %v1277 = vunpack.c.l.b16 %v1081
        %v1278 = vunpack.c.l.b16 %v1082
        %v1279 = vunpack.c.l.b16 %v1083
        %v1280 = vunpack.c.l.b16 %v1084
        %v1281 = vunpack.c.l.b16 %v1085
        %v1282 = vunpack.c.l.b16 %v1086
        %v1283 = vunpack.c.l.b16 %v1087
        %v1284 = vunpack.c.l.b16 %v1088
        %v1285 = vunpack.c.l.b16 %v1089
        %v1286 = vpack.c.b16 %v1263, %v1262
        %v1287 = vpack.c.b16 %v1265, %v1264
        %v1288 = vpack.c.b16 %v1267, %v1266
        %v1289 = vpack.c.b16 %v1269, %v1268
        %v1290 = vpack.c.b16 %v1271, %v1270
        %v1291 = vpack.c.b16 %v1273, %v1272
        %v1292 = vpack.c.b16 %v1275, %v1274
        %v1293 = vpack.c.b16 %v1277, %v1276
        %v1294 = vpack.c.b16 %v1279, %v1278
        %v1295 = vpack.c.b16 %v1281, %v1280
        %v1296 = vpack.c.b16 %v1283, %v1282
        %v1297 = vpack.c.b16 %v1285, %v1284
        %v1299 = vsel %vm340, %v1286, 0
        %v1302 = vsel %vm340, %v1287, 0
        %v1305 = vsel %vm340, %v1288, 0
        %v1308 = vsel %vm340, %v1289, 0
        %v1311 = vsel %vm340, %v1290, 0
        %v1314 = vsel %vm340, %v1291, 0
        %v1317 = vsel %vm340, %v1292, 0
        %v1320 = vsel %vm340, %v1293, 0
        %v1323 = vsel %vm340, %v1294, 0
        %v1326 = vsel %vm340, %v1295, 0
        %v1329 = vsel %vm340, %v1296, 0
        %v1332 = vsel %vm340, %v1297, 0
        %1334 = vmatprep.subr.bf16.mxu0 0
        %1335 = vmatpush1.bf16.msra.mxu0 %v1090
        %1336 = vmatprep.subr.bf16.mxu0 0
        %1337 = vmatpush1.bf16.msra.mxu0 %v1091
        %1338 = vmatprep.subr.bf16.mxu0 0
        %1339 = vmatpush1.bf16.msra.mxu0 %v1092
        %1340 = vmatprep.subr.bf16.mxu0 0
        %1341 = vmatpush1.bf16.msra.mxu0 %v1093
        %1342 = vmatprep.subr.bf16.mxu0 0
        %1343 = vmatpush1.bf16.msra.mxu0 0
        %1344 = vmatprep.subr.bf16.mxu0 0
        %1345 = vmatpush1.bf16.msra.mxu0 0
        %1346 = vmatprep.subr.bf16.mxu0 0
        %1347 = vmatpush1.bf16.msra.mxu0 0
        %1348 = vmatprep.subr.bf16.mxu0 0
        %1349 = vmatpush1.bf16.msra.mxu0 0
        %1350 = vmatprep.subr.bf16.mxu0 0
        %1351 = vmatpush1.bf16.msra.mxu0 0
        %1352 = vmatprep.subr.bf16.mxu0 0
        %1353 = vmatpush1.bf16.msra.mxu0 0
        %1354 = vmatprep.subr.bf16.mxu0 0
        %1355 = vmatpush1.bf16.msra.mxu0 0
        %1356 = vmatprep.subr.bf16.mxu0 0
        %1357 = vmatpush1.bf16.msra.mxu0 0
        %1358 = vmatprep.subr.bf16.mxu0 0
        %1359 = vmatpush1.bf16.msra.mxu0 0
        %1360 = vmatprep.subr.bf16.mxu0 0
        %1361 = vmatpush1.bf16.msra.mxu0 0
        %1362 = vmatprep.subr.bf16.mxu0 0
        %1363 = vmatpush1.bf16.msra.mxu0 0
        %1364 = vmatprep.subr.bf16.mxu0 0
        %1365 = vmatpush1.bf16.msra.mxu0 0
        %1366 = vmatprep.mubr.bf16.mxu0 0
        %1367 = vmatmul.mubr.bf16.gmra.mrb[0].mxu0 %v1299
        %v1368 = vpop.f32.mrb[0].mxu0
        %v1369 = vadd.f32 %v1121, %v1368
        %v1370 = vpop.f32.mrb[0].mxu0
        %v1371 = vpop.f32.mrb[0].mxu0
        %v1372 = vadd.f32 %v1126, %v1371
        %v1373 = vpop.f32.mrb[0].mxu0
        %1374 = vmatprep.mubr.bf16.mxu0 0
        %1375 = vmatmul.mubr.bf16.gmra.mrb[0].mxu0 %v1302
        %v1376 = vpop.f32.mrb[0].mxu0
        %v1377 = vadd.f32 %v1131, %v1376
        %v1378 = vpop.f32.mrb[0].mxu0
        %v1379 = vpop.f32.mrb[0].mxu0
        %v1380 = vadd.f32 %v1136, %v1379
        %v1381 = vpop.f32.mrb[0].mxu0
        %1382 = vmatprep.mubr.bf16.mxu0 0
        %1383 = vmatmul.mubr.bf16.gmra.mrb[0].mxu0 %v1305
        %v1384 = vpop.f32.mrb[0].mxu0
        %v1385 = vadd.f32 %v1141, %v1384
        %v1386 = vpop.f32.mrb[0].mxu0
        %v1387 = vpop.f32.mrb[0].mxu0
        %v1388 = vadd.f32 %v1146, %v1387
        %v1389 = vpop.f32.mrb[0].mxu0
        %1390 = vmatprep.mubr.bf16.mxu0 0
        %1391 = vmatmul.mubr.bf16.gmra.mrb[0].mxu0 %v1308
        %v1392 = vpop.f32.mrb[0].mxu0
        %v1393 = vadd.f32 %v1151, %v1392
        %v1394 = vpop.f32.mrb[0].mxu0
        %v1395 = vpop.f32.mrb[0].mxu0
        %v1396 = vadd.f32 %v1156, %v1395
        %v1397 = vpop.f32.mrb[0].mxu0
        %1398 = vmatprep.mubr.bf16.mxu0 0
        %1399 = vmatmul.mubr.bf16.gmra.mrb[0].mxu0 %v1311
        %v1400 = vpop.f32.mrb[0].mxu0
        %v1401 = vadd.f32 %v1161, %v1400
        %v1402 = vpop.f32.mrb[0].mxu0
        %v1403 = vpop.f32.mrb[0].mxu0
        %v1404 = vadd.f32 %v1166, %v1403
        %v1405 = vpop.f32.mrb[0].mxu0
        %1406 = vmatprep.mubr.bf16.mxu0 0
        %1407 = vmatmul.mubr.bf16.gmra.mrb[0].mxu0 %v1314
        %v1408 = vpop.f32.mrb[0].mxu0
        %v1409 = vadd.f32 %v1171, %v1408
        %v1410 = vpop.f32.mrb[0].mxu0
        %v1411 = vpop.f32.mrb[0].mxu0
        %v1412 = vadd.f32 %v1176, %v1411
        %v1413 = vpop.f32.mrb[0].mxu0
        %1414 = vmatprep.mubr.bf16.mxu0 0
        %1415 = vmatmul.mubr.bf16.gmra.mrb[0].mxu0 %v1317
        %v1416 = vpop.f32.mrb[0].mxu0
        %v1417 = vadd.f32 %v1181, %v1416
        %v1418 = vpop.f32.mrb[0].mxu0
        %v1419 = vpop.f32.mrb[0].mxu0
        %v1420 = vadd.f32 %v1186, %v1419
        %v1421 = vpop.f32.mrb[0].mxu0
        %1422 = vmatprep.mubr.bf16.mxu0 0
        %1423 = vmatmul.mubr.bf16.gmra.mrb[0].mxu0 %v1320
        %v1424 = vpop.f32.mrb[0].mxu0
        %v1425 = vadd.f32 %v1191, %v1424
        %v1426 = vpop.f32.mrb[0].mxu0
        %v1427 = vpop.f32.mrb[0].mxu0
        %v1428 = vadd.f32 %v1196, %v1427
        %v1429 = vpop.f32.mrb[0].mxu0
        %1430 = vmatprep.mubr.bf16.mxu0 0
        %1431 = vmatmul.mubr.bf16.gmra.mrb[0].mxu0 %v1323
        %v1432 = vpop.f32.mrb[0].mxu0
        %v1433 = vadd.f32 %v1201, %v1432
        %v1434 = vpop.f32.mrb[0].mxu0
        %v1435 = vpop.f32.mrb[0].mxu0
        %v1436 = vadd.f32 %v1206, %v1435
        %v1437 = vpop.f32.mrb[0].mxu0
        %1438 = vmatprep.mubr.bf16.mxu0 0
        %1439 = vmatmul.mubr.bf16.gmra.mrb[0].mxu0 %v1326
        %v1440 = vpop.f32.mrb[0].mxu0
        %v1441 = vadd.f32 %v1211, %v1440
        %v1442 = vpop.f32.mrb[0].mxu0
        %v1443 = vpop.f32.mrb[0].mxu0
        %v1444 = vadd.f32 %v1216, %v1443
        %v1445 = vpop.f32.mrb[0].mxu0
        %1446 = vmatprep.mubr.bf16.mxu0 0
        %1447 = vmatmul.mubr.bf16.gmra.mrb[0].mxu0 %v1329
        %v1448 = vpop.f32.mrb[0].mxu0
        %v1449 = vadd.f32 %v1221, %v1448
        %v1450 = vpop.f32.mrb[0].mxu0
        %v1451 = vpop.f32.mrb[0].mxu0
        %v1452 = vadd.f32 %v1226, %v1451
        %v1453 = vpop.f32.mrb[0].mxu0
        %1454 = vmatprep.mubr.bf16.mxu0 0
        %1455 = vmatmul.mubr.bf16.gmra.mrb[0].mxu0 %v1332
        %v1456 = vpop.f32.mrb[0].mxu0
        %v1457 = vadd.f32 %v1231, %v1456
        %v1458 = vpop.f32.mrb[0].mxu0
        %v1459 = vpop.f32.mrb[0].mxu0
        %v1460 = vadd.f32 %v1236, %v1459
        %v1461 = vpop.f32.mrb[0].mxu0
        %1462 = vdwg.mxu0
        %1463 = vxpose.xlu0.b32.start [1/16] %v1369, 128
        %1464 = vxpose.xlu0.b32.cont [2/16] %v1372, 128
        %1465 = vxpose.xlu0.b32.cont [3/16] 0.0, 128
        %1466 = vxpose.xlu0.b32.cont [4/16] 0.0, 128
        %1467 = vxpose.xlu0.b32.cont [5/16] 0.0, 128
        %1468 = vxpose.xlu0.b32.cont [6/16] 0.0, 128
        %1469 = vxpose.xlu0.b32.cont [7/16] 0.0, 128
        %1470 = vxpose.xlu0.b32.cont [8/16] 0.0, 128
        %1471 = vxpose.xlu0.b32.cont [9/16] 0.0, 128
        %1472 = vxpose.xlu0.b32.cont [10/16] 0.0, 128
        %1473 = vxpose.xlu0.b32.cont [11/16] 0.0, 128
        %1474 = vxpose.xlu0.b32.cont [12/16] 0.0, 128
        %1475 = vxpose.xlu0.b32.cont [13/16] 0.0, 128
        %1476 = vxpose.xlu0.b32.cont [14/16] 0.0, 128
        %1477 = vxpose.xlu0.b32.cont [15/16] 0.0, 128
        %1478 = vxpose.xlu0.b32.end [16/16] 0.0, 128
        %v1479 = vpop.trf.xlu0
        %v1480 = vpop.trf.xlu0
        %v1481 = vpop.trf.xlu0
        %v1482 = vpop.trf.xlu0
        %v1483 = vpop.trf.xlu0
        %v1484 = vpop.trf.xlu0
        %v1485 = vpop.trf.xlu0
        %v1486 = vpop.trf.xlu0
        %v1487 = vpop.trf.xlu0
        %v1488 = vpop.trf.xlu0
        %v1489 = vpop.trf.xlu0
        %v1490 = vpop.trf.xlu0
        %v1491 = vpop.trf.xlu0
        %v1492 = vpop.trf.xlu0
        %v1493 = vpop.trf.xlu0
        %v1494 = vpop.trf.xlu0
        %v1495 = vpack.c.bf16 %v1480, %v1479
        %v1496 = vpack.c.bf16 %v1482, %v1481
        %v1497 = vpack.c.bf16 %v1484, %v1483
        %v1498 = vpack.c.bf16 %v1486, %v1485
        %v1499 = vpack.c.bf16 %v1404, %v1401
        %v1500 = vpack.c.bf16 %v1436, %v1433
        %vm1501 = vcmask 130048
        %v1503 = vsel %vm1501, %v1495, 0
        %v1506 = vsel %vm1501, %v1496, 0
        %v1509 = vsel %vm1501, %v1497, 0
        %v1512 = vsel %vm1501, %v1498, 0
        %1514 = vmatprep.subr.bf16.mxu0 0
        %1515 = vmatpush1.bf16.msra.mxu0 %v1499
        %1516 = vmatprep.subr.bf16.mxu0 0
        %1517 = vmatpush1.bf16.msra.mxu0 0
        %1518 = vmatprep.subr.bf16.mxu0 0
        %1519 = vmatpush1.bf16.msra.mxu0 0
        %1520 = vmatprep.subr.bf16.mxu0 0
        %1521 = vmatpush1.bf16.msra.mxu0 0
        %1522 = vmatprep.subr.bf16.mxu0 0
        %1523 = vmatpush1.bf16.msra.mxu0 0
        %1524 = vmatprep.subr.bf16.mxu0 0
        %1525 = vmatpush1.bf16.msra.mxu0 0
        %1526 = vmatprep.subr.bf16.mxu0 0
        %1527 = vmatpush1.bf16.msra.mxu0 0
        %1528 = vmatprep.subr.bf16.mxu0 0
        %1529 = vmatpush1.bf16.msra.mxu0 0
        %1530 = vmatprep.subr.bf16.mxu0 0
        %1531 = vmatpush1.bf16.msra.mxu0 0
        %1532 = vmatprep.subr.bf16.mxu0 0
        %1533 = vmatpush1.bf16.msra.mxu0 0
        %1534 = vmatprep.subr.bf16.mxu0 0
        %1535 = vmatpush1.bf16.msra.mxu0 0
        %1536 = vmatprep.subr.bf16.mxu0 0
        %1537 = vmatpush1.bf16.msra.mxu0 0
        %1538 = vmatprep.subr.bf16.mxu0 0
        %1539 = vmatpush1.bf16.msra.mxu0 0
        %1540 = vmatprep.subr.bf16.mxu0 0
        %1541 = vmatpush1.bf16.msra.mxu0 0
        %1542 = vmatprep.subr.bf16.mxu0 0
        %1543 = vmatpush1.bf16.msra.mxu0 0
        %1544 = vmatprep.subr.bf16.mxu0 0
        %1545 = vmatpush1.bf16.msra.mxu0 0
        %1546 = vmatprep.mubr.bf16.mxu0 0
        %1547 = vmatmul.mubr.bf16.gmra.mrb[0].mxu0 %v1503
        %v1548 = vpop.f32.mrb[0].mxu0
        %v1549 = vadd.f32 0.0, %v1548
        %v1550 = vpop.f32.mrb[0].mxu0
        %v1551 = vpop.f32.mrb[0].mxu0
        %v1552 = vadd.f32 0.0, %v1551
        %v1553 = vpop.f32.mrb[0].mxu0
        %1554 = vmatprep.mubr.bf16.mxu0 0
        %1555 = vmatmul.mubr.bf16.gmra.mrb[0].mxu0 %v1506
        %v1556 = vpop.f32.mrb[0].mxu0
        %v1557 = vadd.f32 0.0, %v1556
        %v1558 = vpop.f32.mrb[0].mxu0
        %v1559 = vpop.f32.mrb[0].mxu0
        %v1560 = vadd.f32 0.0, %v1559
        %v1561 = vpop.f32.mrb[0].mxu0
        %1562 = vmatprep.mubr.bf16.mxu0 0
        %1563 = vmatmul.mubr.bf16.gmra.mrb[0].mxu0 %v1509
        %v1564 = vpop.f32.mrb[0].mxu0
        %v1565 = vadd.f32 0.0, %v1564
        %v1566 = vpop.f32.mrb[0].mxu0
        %v1567 = vpop.f32.mrb[0].mxu0
        %v1568 = vadd.f32 0.0, %v1567
        %v1569 = vpop.f32.mrb[0].mxu0
        %1570 = vmatprep.mubr.bf16.mxu0 0
        %1571 = vmatmul.mubr.bf16.gmra.mrb[0].mxu0 %v1512
        %v1572 = vpop.f32.mrb[0].mxu0
        %v1573 = vadd.f32 0.0, %v1572
        %v1574 = vpop.f32.mrb[0].mxu0
        %v1575 = vpop.f32.mrb[0].mxu0
        %v1576 = vadd.f32 0.0, %v1575
        %v1577 = vpop.f32.mrb[0].mxu0
        %1578 = vdwg.mxu0
        %v1579 = vsel %vm340, %v1549, -inf
        %1580 = vmax.xlane.f32.xlu0 %v1579
        %v1581 = vpop.xlane.xlu0 %1580
        %v1582 = vsel %vm340, %v1552, -inf
        %1583 = vmax.xlane.f32.xlu0 %v1582
        %v1584 = vpop.xlane.xlu0 %1583
        %v1585 = vsel %vm340, %v1557, -inf
        %1586 = vmax.xlane.f32.xlu0 %v1585
        %v1587 = vpop.xlane.xlu0 %1586
        %v1588 = vsel %vm340, %v1560, -inf
        %1589 = vmax.xlane.f32.xlu0 %v1588
        %v1590 = vpop.xlane.xlu0 %1589
        %v1591 = vsel %vm340, %v1565, -inf
        %1592 = vmax.xlane.f32.xlu0 %v1591
        %v1593 = vpop.xlane.xlu0 %1592
        %v1594 = vsel %vm340, %v1568, -inf
        %1595 = vmax.xlane.f32.xlu0 %v1594
        %v1596 = vpop.xlane.xlu0 %1595
        %v1597 = vsel %vm340, %v1573, -inf
        %1598 = vmax.xlane.f32.xlu0 %v1597
        %v1599 = vpop.xlane.xlu0 %1598
        %v1600 = vsel %vm340, %v1576, -inf
        %1601 = vmax.xlane.f32.xlu0 %v1600
        %v1602 = vpop.xlane.xlu0 %1601
        %v1603 = vsub.f32 %v1549, %v1581
        %v1604 = vsub.f32 %v1552, %v1584
        %v1605 = vsub.f32 %v1557, %v1587
        %v1606 = vsub.f32 %v1560, %v1590
        %v1607 = vsub.f32 %v1565, %v1593
        %v1608 = vsub.f32 %v1568, %v1596
        %v1609 = vsub.f32 %v1573, %v1599
        %v1610 = vsub.f32 %v1576, %v1602
        %v1611 = vmul.f32 %v1603, 1.442695
        %v1612 = vpow.pop %v1611
        %v1613 = vmul.f32 %v1604, 1.442695
        %v1614 = vpow.pop %v1613
        %v1615 = vmul.f32 %v1605, 1.442695
        %v1616 = vpow.pop %v1615
        %v1617 = vmul.f32 %v1606, 1.442695
        %v1618 = vpow.pop %v1617
        %v1619 = vmul.f32 %v1607, 1.442695
        %v1620 = vpow.pop %v1619
        %v1621 = vmul.f32 %v1608, 1.442695
        %v1622 = vpow.pop %v1621
        %v1623 = vmul.f32 %v1609, 1.442695
        %v1624 = vpow.pop %v1623
        %v1625 = vmul.f32 %v1610, 1.442695
        %v1626 = vpow.pop %v1625
        %v1627 = vsel %vm340, %v1612, 0.0
        %1628 = vadd.xlane.f32.xlu0 %v1627
        %v1629 = vpop.xlane.xlu0 %1628
        %v1630 = vsel %vm340, %v1614, 0.0
        %1631 = vadd.xlane.f32.xlu0 %v1630
        %v1632 = vpop.xlane.xlu0 %1631
        %v1633 = vsel %vm340, %v1616, 0.0
        %1634 = vadd.xlane.f32.xlu0 %v1633
        %v1635 = vpop.xlane.xlu0 %1634
        %v1636 = vsel %vm340, %v1618, 0.0
        %1637 = vadd.xlane.f32.xlu0 %v1636
        %v1638 = vpop.xlane.xlu0 %1637
        %v1639 = vsel %vm340, %v1620, 0.0
        %1640 = vadd.xlane.f32.xlu0 %v1639
        %v1641 = vpop.xlane.xlu0 %1640
        %v1642 = vsel %vm340, %v1622, 0.0
        %1643 = vadd.xlane.f32.xlu0 %v1642
        %v1644 = vpop.xlane.xlu0 %1643
        %v1645 = vsel %vm340, %v1624, 0.0
        %1646 = vadd.xlane.f32.xlu0 %v1645
        %v1647 = vpop.xlane.xlu0 %1646
        %v1648 = vsel %vm340, %v1626, 0.0
        %1649 = vadd.xlane.f32.xlu0 %v1648
        %v1650 = vpop.xlane.xlu0 %1649
        %v1651 = vrcp.pop %v1629
        %v1652 = vrcp.pop %v1632
        %v1653 = vrcp.pop %v1635
        %v1654 = vrcp.pop %v1638
        %v1655 = vrcp.pop %v1641
        %v1656 = vrcp.pop %v1644
        %v1657 = vrcp.pop %v1647
        %v1658 = vrcp.pop %v1650
        %v1659 = vmul.f32 %v1612, %v1651
        %v1660 = vmul.f32 %v1614, %v1652
        %v1661 = vmul.f32 %v1616, %v1653
        %v1662 = vmul.f32 %v1618, %v1654
        %v1663 = vmul.f32 %v1620, %v1655
        %v1664 = vmul.f32 %v1622, %v1656
        %v1665 = vmul.f32 %v1624, %v1657
        %v1666 = vmul.f32 %v1626, %v1658
        %v1667 = vpack.c.bf16 %v1660, %v1659
        %v1668 = vpack.c.bf16 %v1662, %v1661
        %v1669 = vpack.c.bf16 %v1664, %v1663
        %v1670 = vpack.c.bf16 %v1666, %v1665
        %v1672 = vsel %vm340, %v1500, 0
        %v1675 = vsel %vm340, %v1667, 0
        %v1678 = vsel %vm340, %v1668, 0
        %v1681 = vsel %vm340, %v1669, 0
        %v1684 = vsel %vm340, %v1670, 0
        %1686 = vmatprep.subr.bf16.mxu0 0
        %1687 = vmatpush1.bf16.xpose.msra.mxu0 %v1675
        %1688 = vmatprep.subr.bf16.mxu0 0
        %1689 = vmatpush1.bf16.xpose.msra.mxu0 %v1678
        %1690 = vmatprep.subr.bf16.mxu0 0
        %1691 = vmatpush1.bf16.xpose.msra.mxu0 %v1681
        %1692 = vmatprep.subr.bf16.mxu0 0
        %1693 = vmatpush1.bf16.xpose.msra.mxu0 %v1684
        %1694 = vmatprep.subr.bf16.mxu0 0
        %1695 = vmatpush1.bf16.xpose.msra.mxu0 0
        %1696 = vmatprep.subr.bf16.mxu0 0
        %1697 = vmatpush1.bf16.xpose.msra.mxu0 0
        %1698 = vmatprep.subr.bf16.mxu0 0
        %1699 = vmatpush1.bf16.xpose.msra.mxu0 0
        %1700 = vmatprep.subr.bf16.mxu0 0
        %1701 = vmatpush1.bf16.xpose.msra.mxu0 0
        %1702 = vmatprep.subr.bf16.mxu0 0
        %1703 = vmatpush1.bf16.xpose.msra.mxu0 0
        %1704 = vmatprep.subr.bf16.mxu0 0
        %1705 = vmatpush1.bf16.xpose.msra.mxu0 0
        %1706 = vmatprep.subr.bf16.mxu0 0
        %1707 = vmatpush1.bf16.xpose.msra.mxu0 0
        %1708 = vmatprep.subr.bf16.mxu0 0
        %1709 = vmatpush1.bf16.xpose.msra.mxu0 0
        %1710 = vmatprep.subr.bf16.mxu0 0
        %1711 = vmatpush1.bf16.xpose.msra.mxu0 0
        %1712 = vmatprep.subr.bf16.mxu0 0
        %1713 = vmatpush1.bf16.xpose.msra.mxu0 0
        %1714 = vmatprep.subr.bf16.mxu0 0
        %1715 = vmatpush1.bf16.xpose.msra.mxu0 0
        %1716 = vmatprep.subr.bf16.mxu0 0
        %1717 = vmatpush1.bf16.xpose.msra.mxu0 0
        %1718 = vmatprep.mubr.bf16.mxu0 0
        %1719 = vmatmul.mubr.bf16.gmra.mrb[0].mxu0 %v1672
        %v1720 = vpop.f32.mrb[0].mxu0
        %v1721 = vadd.f32 0.0, %v1720
        %v1722 = vpop.f32.mrb[0].mxu0
        %v1723 = vpop.f32.mrb[0].mxu0
        %v1724 = vadd.f32 0.0, %v1723
        %v1725 = vpop.f32.mrb[0].mxu0
        %1726 = vdwg.mxu0
        %1727 = vst.msk [vmem:[#allocation2] sm:$0xff] %vm340, %v1721
        %1728 = vst.msk [vmem:[#allocation2 + $0x8] sm:$0xff] %vm340, %v1724
        %1729 = vxpose.xlu0.b32.start [1/16] %v1377, 128
        %1730 = vxpose.xlu0.b32.cont [2/16] %v1380, 128
        %1731 = vxpose.xlu0.b32.cont [3/16] 0.0, 128
        %1732 = vxpose.xlu0.b32.cont [4/16] 0.0, 128
        %1733 = vxpose.xlu0.b32.cont [5/16] 0.0, 128
        %1734 = vxpose.xlu0.b32.cont [6/16] 0.0, 128
        %1735 = vxpose.xlu0.b32.cont [7/16] 0.0, 128
        %1736 = vxpose.xlu0.b32.cont [8/16] 0.0, 128
        %1737 = vxpose.xlu0.b32.cont [9/16] 0.0, 128
        %1738 = vxpose.xlu0.b32.cont [10/16] 0.0, 128
        %1739 = vxpose.xlu0.b32.cont [11/16] 0.0, 128
        %1740 = vxpose.xlu0.b32.cont [12/16] 0.0, 128
        %1741 = vxpose.xlu0.b32.cont [13/16] 0.0, 128
        %1742 = vxpose.xlu0.b32.cont [14/16] 0.0, 128
        %1743 = vxpose.xlu0.b32.cont [15/16] 0.0, 128
        %1744 = vxpose.xlu0.b32.end [16/16] 0.0, 128
        %v1745 = vpop.trf.xlu0
        %v1746 = vpop.trf.xlu0
        %v1747 = vpop.trf.xlu0
        %v1748 = vpop.trf.xlu0
        %v1749 = vpop.trf.xlu0
        %v1750 = vpop.trf.xlu0
        %v1751 = vpop.trf.xlu0
        %v1752 = vpop.trf.xlu0
        %v1753 = vpop.trf.xlu0
        %v1754 = vpop.trf.xlu0
        %v1755 = vpop.trf.xlu0
        %v1756 = vpop.trf.xlu0
        %v1757 = vpop.trf.xlu0
        %v1758 = vpop.trf.xlu0
        %v1759 = vpop.trf.xlu0
        %v1760 = vpop.trf.xlu0
        %v1761 = vpack.c.bf16 %v1746, %v1745
        %v1762 = vpack.c.bf16 %v1748, %v1747
        %v1763 = vpack.c.bf16 %v1750, %v1749
        %v1764 = vpack.c.bf16 %v1752, %v1751
        %v1765 = vpack.c.bf16 %v1412, %v1409
        %v1766 = vpack.c.bf16 %v1444, %v1441
        %v1768 = vsel %vm1501, %v1761, 0
        %v1771 = vsel %vm1501, %v1762, 0
        %v1774 = vsel %vm1501, %v1763, 0
        %v1777 = vsel %vm1501, %v1764, 0
        %1779 = vmatprep.subr.bf16.mxu0 0
        %1780 = vmatpush1.bf16.msra.mxu0 %v1765
        %1781 = vmatprep.subr.bf16.mxu0 0
        %1782 = vmatpush1.bf16.msra.mxu0 0
        %1783 = vmatprep.subr.bf16.mxu0 0
        %1784 = vmatpush1.bf16.msra.mxu0 0
        %1785 = vmatprep.subr.bf16.mxu0 0
        %1786 = vmatpush1.bf16.msra.mxu0 0
        %1787 = vmatprep.subr.bf16.mxu0 0
        %1788 = vmatpush1.bf16.msra.mxu0 0
        %1789 = vmatprep.subr.bf16.mxu0 0
        %1790 = vmatpush1.bf16.msra.mxu0 0
        %1791 = vmatprep.subr.bf16.mxu0 0
        %1792 = vmatpush1.bf16.msra.mxu0 0
        %1793 = vmatprep.subr.bf16.mxu0 0
        %1794 = vmatpush1.bf16.msra.mxu0 0
        %1795 = vmatprep.subr.bf16.mxu0 0
        %1796 = vmatpush1.bf16.msra.mxu0 0
        %1797 = vmatprep.subr.bf16.mxu0 0
        %1798 = vmatpush1.bf16.msra.mxu0 0
        %1799 = vmatprep.subr.bf16.mxu0 0
        %1800 = vmatpush1.bf16.msra.mxu0 0
        %1801 = vmatprep.subr.bf16.mxu0 0
        %1802 = vmatpush1.bf16.msra.mxu0 0
        %1803 = vmatprep.subr.bf16.mxu0 0
        %1804 = vmatpush1.bf16.msra.mxu0 0
        %1805 = vmatprep.subr.bf16.mxu0 0
        %1806 = vmatpush1.bf16.msra.mxu0 0
        %1807 = vmatprep.subr.bf16.mxu0 0
        %1808 = vmatpush1.bf16.msra.mxu0 0
        %1809 = vmatprep.subr.bf16.mxu0 0
        %1810 = vmatpush1.bf16.msra.mxu0 0
        %1811 = vmatprep.mubr.bf16.mxu0 0
        %1812 = vmatmul.mubr.bf16.gmra.mrb[0].mxu0 %v1768
        %v1813 = vpop.f32.mrb[0].mxu0
        %v1814 = vadd.f32 0.0, %v1813
        %v1815 = vpop.f32.mrb[0].mxu0
        %v1816 = vpop.f32.mrb[0].mxu0
        %v1817 = vadd.f32 0.0, %v1816
        %v1818 = vpop.f32.mrb[0].mxu0
        %1819 = vmatprep.mubr.bf16.mxu0 0
        %1820 = vmatmul.mubr.bf16.gmra.mrb[0].mxu0 %v1771
        %v1821 = vpop.f32.mrb[0].mxu0
        %v1822 = vadd.f32 0.0, %v1821
        %v1823 = vpop.f32.mrb[0].mxu0
        %v1824 = vpop.f32.mrb[0].mxu0
        %v1825 = vadd.f32 0.0, %v1824
        %v1826 = vpop.f32.mrb[0].mxu0
        %1827 = vmatprep.mubr.bf16.mxu0 0
        %1828 = vmatmul.mubr.bf16.gmra.mrb[0].mxu0 %v1774
        %v1829 = vpop.f32.mrb[0].mxu0
        %v1830 = vadd.f32 0.0, %v1829
        %v1831 = vpop.f32.mrb[0].mxu0
        %v1832 = vpop.f32.mrb[0].mxu0
        %v1833 = vadd.f32 0.0, %v1832
        %v1834 = vpop.f32.mrb[0].mxu0
        %1835 = vmatprep.mubr.bf16.mxu0 0
        %1836 = vmatmul.mubr.bf16.gmra.mrb[0].mxu0 %v1777
        %v1837 = vpop.f32.mrb[0].mxu0
        %v1838 = vadd.f32 0.0, %v1837
        %v1839 = vpop.f32.mrb[0].mxu0
        %v1840 = vpop.f32.mrb[0].mxu0
        %v1841 = vadd.f32 0.0, %v1840
        %v1842 = vpop.f32.mrb[0].mxu0
        %1843 = vdwg.mxu0
        %v1844 = vsel %vm340, %v1814, -inf
        %1845 = vmax.xlane.f32.xlu0 %v1844
        %v1846 = vpop.xlane.xlu0 %1845
        %v1847 = vsel %vm340, %v1817, -inf
        %1848 = vmax.xlane.f32.xlu0 %v1847
        %v1849 = vpop.xlane.xlu0 %1848
        %v1850 = vsel %vm340, %v1822, -inf
        %1851 = vmax.xlane.f32.xlu0 %v1850
        %v1852 = vpop.xlane.xlu0 %1851
        %v1853 = vsel %vm340, %v1825, -inf
        %1854 = vmax.xlane.f32.xlu0 %v1853
        %v1855 = vpop.xlane.xlu0 %1854
        %v1856 = vsel %vm340, %v1830, -inf
        %1857 = vmax.xlane.f32.xlu0 %v1856
        %v1858 = vpop.xlane.xlu0 %1857
        %v1859 = vsel %vm340, %v1833, -inf
        %1860 = vmax.xlane.f32.xlu0 %v1859
        %v1861 = vpop.xlane.xlu0 %1860
        %v1862 = vsel %vm340, %v1838, -inf
        %1863 = vmax.xlane.f32.xlu0 %v1862
        %v1864 = vpop.xlane.xlu0 %1863
        %v1865 = vsel %vm340, %v1841, -inf
        %1866 = vmax.xlane.f32.xlu0 %v1865
        %v1867 = vpop.xlane.xlu0 %1866
        %v1868 = vsub.f32 %v1814, %v1846
        %v1869 = vsub.f32 %v1817, %v1849
        %v1870 = vsub.f32 %v1822, %v1852
        %v1871 = vsub.f32 %v1825, %v1855
        %v1872 = vsub.f32 %v1830, %v1858
        %v1873 = vsub.f32 %v1833, %v1861
        %v1874 = vsub.f32 %v1838, %v1864
        %v1875 = vsub.f32 %v1841, %v1867
        %v1876 = vmul.f32 %v1868, 1.442695
        %v1877 = vpow.pop %v1876
        %v1878 = vmul.f32 %v1869, 1.442695
        %v1879 = vpow.pop %v1878
        %v1880 = vmul.f32 %v1870, 1.442695
        %v1881 = vpow.pop %v1880
        %v1882 = vmul.f32 %v1871, 1.442695
        %v1883 = vpow.pop %v1882
        %v1884 = vmul.f32 %v1872, 1.442695
        %v1885 = vpow.pop %v1884
        %v1886 = vmul.f32 %v1873, 1.442695
        %v1887 = vpow.pop %v1886
        %v1888 = vmul.f32 %v1874, 1.442695
        %v1889 = vpow.pop %v1888
        %v1890 = vmul.f32 %v1875, 1.442695
        %v1891 = vpow.pop %v1890
        %v1892 = vsel %vm340, %v1877, 0.0
        %1893 = vadd.xlane.f32.xlu0 %v1892
        %v1894 = vpop.xlane.xlu0 %1893
        %v1895 = vsel %vm340, %v1879, 0.0
        %1896 = vadd.xlane.f32.xlu0 %v1895
        %v1897 = vpop.xlane.xlu0 %1896
        %v1898 = vsel %vm340, %v1881, 0.0
        %1899 = vadd.xlane.f32.xlu0 %v1898
        %v1900 = vpop.xlane.xlu0 %1899
        %v1901 = vsel %vm340, %v1883, 0.0
        %1902 = vadd.xlane.f32.xlu0 %v1901
        %v1903 = vpop.xlane.xlu0 %1902
        %v1904 = vsel %vm340, %v1885, 0.0
        %1905 = vadd.xlane.f32.xlu0 %v1904
        %v1906 = vpop.xlane.xlu0 %1905
        %v1907 = vsel %vm340, %v1887, 0.0
        %1908 = vadd.xlane.f32.xlu0 %v1907
        %v1909 = vpop.xlane.xlu0 %1908
        %v1910 = vsel %vm340, %v1889, 0.0
        %1911 = vadd.xlane.f32.xlu0 %v1910
        %v1912 = vpop.xlane.xlu0 %1911
        %v1913 = vsel %vm340, %v1891, 0.0
        %1914 = vadd.xlane.f32.xlu0 %v1913
        %v1915 = vpop.xlane.xlu0 %1914
        %v1916 = vrcp.pop %v1894
        %v1917 = vrcp.pop %v1897
        %v1918 = vrcp.pop %v1900
        %v1919 = vrcp.pop %v1903
        %v1920 = vrcp.pop %v1906
        %v1921 = vrcp.pop %v1909
        %v1922 = vrcp.pop %v1912
        %v1923 = vrcp.pop %v1915
        %v1924 = vmul.f32 %v1877, %v1916
        %v1925 = vmul.f32 %v1879, %v1917
        %v1926 = vmul.f32 %v1881, %v1918
        %v1927 = vmul.f32 %v1883, %v1919
        %v1928 = vmul.f32 %v1885, %v1920
        %v1929 = vmul.f32 %v1887, %v1921
        %v1930 = vmul.f32 %v1889, %v1922
        %v1931 = vmul.f32 %v1891, %v1923
        %v1932 = vpack.c.bf16 %v1925, %v1924
        %v1933 = vpack.c.bf16 %v1927, %v1926
        %v1934 = vpack.c.bf16 %v1929, %v1928
        %v1935 = vpack.c.bf16 %v1931, %v1930
        %v1937 = vsel %vm340, %v1766, 0
        %v1940 = vsel %vm340, %v1932, 0
        %v1943 = vsel %vm340, %v1933, 0
        %v1946 = vsel %vm340, %v1934, 0
        %v1949 = vsel %vm340, %v1935, 0
        %1951 = vmatprep.subr.bf16.mxu0 0
        %1952 = vmatpush1.bf16.xpose.msra.mxu0 %v1940
        %1953 = vmatprep.subr.bf16.mxu0 0
        %1954 = vmatpush1.bf16.xpose.msra.mxu0 %v1943
        %1955 = vmatprep.subr.bf16.mxu0 0
        %1956 = vmatpush1.bf16.xpose.msra.mxu0 %v1946
        %1957 = vmatprep.subr.bf16.mxu0 0
        %1958 = vmatpush1.bf16.xpose.msra.mxu0 %v1949
        %1959 = vmatprep.subr.bf16.mxu0 0
        %1960 = vmatpush1.bf16.xpose.msra.mxu0 0
        %1961 = vmatprep.subr.bf16.mxu0 0
        %1962 = vmatpush1.bf16.xpose.msra.mxu0 0
        %1963 = vmatprep.subr.bf16.mxu0 0
        %1964 = vmatpush1.bf16.xpose.msra.mxu0 0
        %1965 = vmatprep.subr.bf16.mxu0 0
        %1966 = vmatpush1.bf16.xpose.msra.mxu0 0
        %1967 = vmatprep.subr.bf16.mxu0 0
        %1968 = vmatpush1.bf16.xpose.msra.mxu0 0
        %1969 = vmatprep.subr.bf16.mxu0 0
        %1970 = vmatpush1.bf16.xpose.msra.mxu0 0
        %1971 = vmatprep.subr.bf16.mxu0 0
        %1972 = vmatpush1.bf16.xpose.msra.mxu0 0
        %1973 = vmatprep.subr.bf16.mxu0 0
        %1974 = vmatpush1.bf16.xpose.msra.mxu0 0
        %1975 = vmatprep.subr.bf16.mxu0 0
        %1976 = vmatpush1.bf16.xpose.msra.mxu0 0
        %1977 = vmatprep.subr.bf16.mxu0 0
        %1978 = vmatpush1.bf16.xpose.msra.mxu0 0
        %1979 = vmatprep.subr.bf16.mxu0 0
        %1980 = vmatpush1.bf16.xpose.msra.mxu0 0
        %1981 = vmatprep.subr.bf16.mxu0 0
        %1982 = vmatpush1.bf16.xpose.msra.mxu0 0
        %1983 = vmatprep.mubr.bf16.mxu0 0
        %1984 = vmatmul.mubr.bf16.gmra.mrb[0].mxu0 %v1937
        %v1985 = vpop.f32.mrb[0].mxu0
        %v1986 = vadd.f32 0.0, %v1985
        %v1987 = vpop.f32.mrb[0].mxu0
        %v1988 = vpop.f32.mrb[0].mxu0
        %v1989 = vadd.f32 0.0, %v1988
        %v1990 = vpop.f32.mrb[0].mxu0
        %1991 = vdwg.mxu0
        %1992 = vst.msk [vmem:[#allocation2 + $0x10] sm:$0xff] %vm340, %v1986
        %1993 = vst.msk [vmem:[#allocation2 + $0x18] sm:$0xff] %vm340, %v1989
        %1994 = vxpose.xlu0.b32.start [1/16] %v1385, 128
        %1995 = vxpose.xlu0.b32.cont [2/16] %v1388, 128
        %1996 = vxpose.xlu0.b32.cont [3/16] 0.0, 128
        %1997 = vxpose.xlu0.b32.cont [4/16] 0.0, 128
        %1998 = vxpose.xlu0.b32.cont [5/16] 0.0, 128
        %1999 = vxpose.xlu0.b32.cont [6/16] 0.0, 128
        %2000 = vxpose.xlu0.b32.cont [7/16] 0.0, 128
        %2001 = vxpose.xlu0.b32.cont [8/16] 0.0, 128
        %2002 = vxpose.xlu0.b32.cont [9/16] 0.0, 128
        %2003 = vxpose.xlu0.b32.cont [10/16] 0.0, 128
        %2004 = vxpose.xlu0.b32.cont [11/16] 0.0, 128
        %2005 = vxpose.xlu0.b32.cont [12/16] 0.0, 128
        %2006 = vxpose.xlu0.b32.cont [13/16] 0.0, 128
        %2007 = vxpose.xlu0.b32.cont [14/16] 0.0, 128
        %2008 = vxpose.xlu0.b32.cont [15/16] 0.0, 128
        %2009 = vxpose.xlu0.b32.end [16/16] 0.0, 128
        %v2010 = vpop.trf.xlu0
        %v2011 = vpop.trf.xlu0
        %v2012 = vpop.trf.xlu0
        %v2013 = vpop.trf.xlu0
        %v2014 = vpop.trf.xlu0
        %v2015 = vpop.trf.xlu0
        %v2016 = vpop.trf.xlu0
        %v2017 = vpop.trf.xlu0
        %v2018 = vpop.trf.xlu0
        %v2019 = vpop.trf.xlu0
        %v2020 = vpop.trf.xlu0
        %v2021 = vpop.trf.xlu0
        %v2022 = vpop.trf.xlu0
        %v2023 = vpop.trf.xlu0
        %v2024 = vpop.trf.xlu0
        %v2025 = vpop.trf.xlu0
        %v2026 = vpack.c.bf16 %v2011, %v2010
        %v2027 = vpack.c.bf16 %v2013, %v2012
        %v2028 = vpack.c.bf16 %v2015, %v2014
        %v2029 = vpack.c.bf16 %v2017, %v2016
        %v2030 = vpack.c.bf16 %v1420, %v1417
        %v2031 = vpack.c.bf16 %v1452, %v1449
        %v2033 = vsel %vm1501, %v2026, 0
        %v2036 = vsel %vm1501, %v2027, 0
        %v2039 = vsel %vm1501, %v2028, 0
        %v2042 = vsel %vm1501, %v2029, 0
        %2044 = vmatprep.subr.bf16.mxu0 0
        %2045 = vmatpush1.bf16.msra.mxu0 %v2030
        %2046 = vmatprep.subr.bf16.mxu0 0
        %2047 = vmatpush1.bf16.msra.mxu0 0
        %2048 = vmatprep.subr.bf16.mxu0 0
        %2049 = vmatpush1.bf16.msra.mxu0 0
        %2050 = vmatprep.subr.bf16.mxu0 0
        %2051 = vmatpush1.bf16.msra.mxu0 0
        %2052 = vmatprep.subr.bf16.mxu0 0
        %2053 = vmatpush1.bf16.msra.mxu0 0
        %2054 = vmatprep.subr.bf16.mxu0 0
        %2055 = vmatpush1.bf16.msra.mxu0 0
        %2056 = vmatprep.subr.bf16.mxu0 0
        %2057 = vmatpush1.bf16.msra.mxu0 0
        %2058 = vmatprep.subr.bf16.mxu0 0
        %2059 = vmatpush1.bf16.msra.mxu0 0
        %2060 = vmatprep.subr.bf16.mxu0 0
        %2061 = vmatpush1.bf16.msra.mxu0 0
        %2062 = vmatprep.subr.bf16.mxu0 0
        %2063 = vmatpush1.bf16.msra.mxu0 0
        %2064 = vmatprep.subr.bf16.mxu0 0
        %2065 = vmatpush1.bf16.msra.mxu0 0
        %2066 = vmatprep.subr.bf16.mxu0 0
        %2067 = vmatpush1.bf16.msra.mxu0 0
        %2068 = vmatprep.subr.bf16.mxu0 0
        %2069 = vmatpush1.bf16.msra.mxu0 0
        %2070 = vmatprep.subr.bf16.mxu0 0
        %2071 = vmatpush1.bf16.msra.mxu0 0
        %2072 = vmatprep.subr.bf16.mxu0 0
        %2073 = vmatpush1.bf16.msra.mxu0 0
        %2074 = vmatprep.subr.bf16.mxu0 0
        %2075 = vmatpush1.bf16.msra.mxu0 0
        %2076 = vmatprep.mubr.bf16.mxu0 0
        %2077 = vmatmul.mubr.bf16.gmra.mrb[0].mxu0 %v2033
        %v2078 = vpop.f32.mrb[0].mxu0
        %v2079 = vadd.f32 0.0, %v2078
        %v2080 = vpop.f32.mrb[0].mxu0
        %v2081 = vpop.f32.mrb[0].mxu0
        %v2082 = vadd.f32 0.0, %v2081
        %v2083 = vpop.f32.mrb[0].mxu0
        %2084 = vmatprep.mubr.bf16.mxu0 0
        %2085 = vmatmul.mubr.bf16.gmra.mrb[0].mxu0 %v2036
        %v2086 = vpop.f32.mrb[0].mxu0
        %v2087 = vadd.f32 0.0, %v2086
        %v2088 = vpop.f32.mrb[0].mxu0
        %v2089 = vpop.f32.mrb[0].mxu0
        %v2090 = vadd.f32 0.0, %v2089
        %v2091 = vpop.f32.mrb[0].mxu0
        %2092 = vmatprep.mubr.bf16.mxu0 0
        %2093 = vmatmul.mubr.bf16.gmra.mrb[0].mxu0 %v2039
        %v2094 = vpop.f32.mrb[0].mxu0
        %v2095 = vadd.f32 0.0, %v2094
        %v2096 = vpop.f32.mrb[0].mxu0
        %v2097 = vpop.f32.mrb[0].mxu0
        %v2098 = vadd.f32 0.0, %v2097
        %v2099 = vpop.f32.mrb[0].mxu0
        %2100 = vmatprep.mubr.bf16.mxu0 0
        %2101 = vmatmul.mubr.bf16.gmra.mrb[0].mxu0 %v2042
        %v2102 = vpop.f32.mrb[0].mxu0
        %v2103 = vadd.f32 0.0, %v2102
        %v2104 = vpop.f32.mrb[0].mxu0
        %v2105 = vpop.f32.mrb[0].mxu0
        %v2106 = vadd.f32 0.0, %v2105
        %v2107 = vpop.f32.mrb[0].mxu0
        %2108 = vdwg.mxu0
        %v2109 = vsel %vm340, %v2079, -inf
        %2110 = vmax.xlane.f32.xlu0 %v2109
        %v2111 = vpop.xlane.xlu0 %2110
        %v2112 = vsel %vm340, %v2082, -inf
        %2113 = vmax.xlane.f32.xlu0 %v2112
        %v2114 = vpop.xlane.xlu0 %2113
        %v2115 = vsel %vm340, %v2087, -inf
        %2116 = vmax.xlane.f32.xlu0 %v2115
        %v2117 = vpop.xlane.xlu0 %2116
        %v2118 = vsel %vm340, %v2090, -inf
        %2119 = vmax.xlane.f32.xlu0 %v2118
        %v2120 = vpop.xlane.xlu0 %2119
        %v2121 = vsel %vm340, %v2095, -inf
        %2122 = vmax.xlane.f32.xlu0 %v2121
        %v2123 = vpop.xlane.xlu0 %2122
        %v2124 = vsel %vm340, %v2098, -inf
        %2125 = vmax.xlane.f32.xlu0 %v2124
        %v2126 = vpop.xlane.xlu0 %2125
        %v2127 = vsel %vm340, %v2103, -inf
        %2128 = vmax.xlane.f32.xlu0 %v2127
        %v2129 = vpop.xlane.xlu0 %2128
        %v2130 = vsel %vm340, %v2106, -inf
        %2131 = vmax.xlane.f32.xlu0 %v2130
        %v2132 = vpop.xlane.xlu0 %2131
        %v2133 = vsub.f32 %v2079, %v2111
        %v2134 = vsub.f32 %v2082, %v2114
        %v2135 = vsub.f32 %v2087, %v2117
        %v2136 = vsub.f32 %v2090, %v2120
        %v2137 = vsub.f32 %v2095, %v2123
        %v2138 = vsub.f32 %v2098, %v2126
        %v2139 = vsub.f32 %v2103, %v2129
        %v2140 = vsub.f32 %v2106, %v2132
        %v2141 = vmul.f32 %v2133, 1.442695
        %v2142 = vpow.pop %v2141
        %v2143 = vmul.f32 %v2134, 1.442695
        %v2144 = vpow.pop %v2143
        %v2145 = vmul.f32 %v2135, 1.442695
        %v2146 = vpow.pop %v2145
        %v2147 = vmul.f32 %v2136, 1.442695
        %v2148 = vpow.pop %v2147
        %v2149 = vmul.f32 %v2137, 1.442695
        %v2150 = vpow.pop %v2149
        %v2151 = vmul.f32 %v2138, 1.442695
        %v2152 = vpow.pop %v2151
        %v2153 = vmul.f32 %v2139, 1.442695
        %v2154 = vpow.pop %v2153
        %v2155 = vmul.f32 %v2140, 1.442695
        %v2156 = vpow.pop %v2155
        %v2157 = vsel %vm340, %v2142, 0.0
        %2158 = vadd.xlane.f32.xlu0 %v2157
        %v2159 = vpop.xlane.xlu0 %2158
        %v2160 = vsel %vm340, %v2144, 0.0
        %2161 = vadd.xlane.f32.xlu0 %v2160
        %v2162 = vpop.xlane.xlu0 %2161
        %v2163 = vsel %vm340, %v2146, 0.0
        %2164 = vadd.xlane.f32.xlu0 %v2163
        %v2165 = vpop.xlane.xlu0 %2164
        %v2166 = vsel %vm340, %v2148, 0.0
        %2167 = vadd.xlane.f32.xlu0 %v2166
        %v2168 = vpop.xlane.xlu0 %2167
        %v2169 = vsel %vm340, %v2150, 0.0
        %2170 = vadd.xlane.f32.xlu0 %v2169
        %v2171 = vpop.xlane.xlu0 %2170
        %v2172 = vsel %vm340, %v2152, 0.0
        %2173 = vadd.xlane.f32.xlu0 %v2172
        %v2174 = vpop.xlane.xlu0 %2173
        %v2175 = vsel %vm340, %v2154, 0.0
        %2176 = vadd.xlane.f32.xlu0 %v2175
        %v2177 = vpop.xlane.xlu0 %2176
        %v2178 = vsel %vm340, %v2156, 0.0
        %2179 = vadd.xlane.f32.xlu0 %v2178
        %v2180 = vpop.xlane.xlu0 %2179
        %v2181 = vrcp.pop %v2159
        %v2182 = vrcp.pop %v2162
        %v2183 = vrcp.pop %v2165
        %v2184 = vrcp.pop %v2168
        %v2185 = vrcp.pop %v2171
        %v2186 = vrcp.pop %v2174
        %v2187 = vrcp.pop %v2177
        %v2188 = vrcp.pop %v2180
        %v2189 = vmul.f32 %v2142, %v2181
        %v2190 = vmul.f32 %v2144, %v2182
        %v2191 = vmul.f32 %v2146, %v2183
        %v2192 = vmul.f32 %v2148, %v2184
        %v2193 = vmul.f32 %v2150, %v2185
        %v2194 = vmul.f32 %v2152, %v2186
        %v2195 = vmul.f32 %v2154, %v2187
        %v2196 = vmul.f32 %v2156, %v2188
        %v2197 = vpack.c.bf16 %v2190, %v2189
        %v2198 = vpack.c.bf16 %v2192, %v2191
        %v2199 = vpack.c.bf16 %v2194, %v2193
        %v2200 = vpack.c.bf16 %v2196, %v2195
        %v2202 = vsel %vm340, %v2031, 0
        %v2205 = vsel %vm340, %v2197, 0
        %v2208 = vsel %vm340, %v2198, 0
        %v2211 = vsel %vm340, %v2199, 0
        %v2214 = vsel %vm340, %v2200, 0
        %2216 = vmatprep.subr.bf16.mxu0 0
        %2217 = vmatpush1.bf16.xpose.msra.mxu0 %v2205
        %2218 = vmatprep.subr.bf16.mxu0 0
        %2219 = vmatpush1.bf16.xpose.msra.mxu0 %v2208
        %2220 = vmatprep.subr.bf16.mxu0 0
        %2221 = vmatpush1.bf16.xpose.msra.mxu0 %v2211
        %2222 = vmatprep.subr.bf16.mxu0 0
        %2223 = vmatpush1.bf16.xpose.msra.mxu0 %v2214
        %2224 = vmatprep.subr.bf16.mxu0 0
        %2225 = vmatpush1.bf16.xpose.msra.mxu0 0
        %2226 = vmatprep.subr.bf16.mxu0 0
        %2227 = vmatpush1.bf16.xpose.msra.mxu0 0
        %2228 = vmatprep.subr.bf16.mxu0 0
        %2229 = vmatpush1.bf16.xpose.msra.mxu0 0
        %2230 = vmatprep.subr.bf16.mxu0 0
        %2231 = vmatpush1.bf16.xpose.msra.mxu0 0
        %2232 = vmatprep.subr.bf16.mxu0 0
        %2233 = vmatpush1.bf16.xpose.msra.mxu0 0
        %2234 = vmatprep.subr.bf16.mxu0 0
        %2235 = vmatpush1.bf16.xpose.msra.mxu0 0
        %2236 = vmatprep.subr.bf16.mxu0 0
        %2237 = vmatpush1.bf16.xpose.msra.mxu0 0
        %2238 = vmatprep.subr.bf16.mxu0 0
        %2239 = vmatpush1.bf16.xpose.msra.mxu0 0
        %2240 = vmatprep.subr.bf16.mxu0 0
        %2241 = vmatpush1.bf16.xpose.msra.mxu0 0
        %2242 = vmatprep.subr.bf16.mxu0 0
        %2243 = vmatpush1.bf16.xpose.msra.mxu0 0
        %2244 = vmatprep.subr.bf16.mxu0 0
        %2245 = vmatpush1.bf16.xpose.msra.mxu0 0
        %2246 = vmatprep.subr.bf16.mxu0 0
        %2247 = vmatpush1.bf16.xpose.msra.mxu0 0
        %2248 = vmatprep.mubr.bf16.mxu0 0
        %2249 = vmatmul.mubr.bf16.gmra.mrb[0].mxu0 %v2202
        %v2250 = vpop.f32.mrb[0].mxu0
        %v2251 = vadd.f32 0.0, %v2250
        %v2252 = vpop.f32.mrb[0].mxu0
        %v2253 = vpop.f32.mrb[0].mxu0
        %v2254 = vadd.f32 0.0, %v2253
        %v2255 = vpop.f32.mrb[0].mxu0
        %2256 = vdwg.mxu0
        %2257 = vst.msk [vmem:[#allocation2 + $0x20] sm:$0xff] %vm340, %v2251
        %2258 = vst.msk [vmem:[#allocation2 + $0x28] sm:$0xff] %vm340, %v2254
        %2259 = vxpose.xlu0.b32.start [1/16] %v1393, 128
        %2260 = vxpose.xlu0.b32.cont [2/16] %v1396, 128
        %2261 = vxpose.xlu0.b32.cont [3/16] 0.0, 128
        %2262 = vxpose.xlu0.b32.cont [4/16] 0.0, 128
        %2263 = vxpose.xlu0.b32.cont [5/16] 0.0, 128
        %2264 = vxpose.xlu0.b32.cont [6/16] 0.0, 128
        %2265 = vxpose.xlu0.b32.cont [7/16] 0.0, 128
        %2266 = vxpose.xlu0.b32.cont [8/16] 0.0, 128
        %2267 = vxpose.xlu0.b32.cont [9/16] 0.0, 128
        %2268 = vxpose.xlu0.b32.cont [10/16] 0.0, 128
        %2269 = vxpose.xlu0.b32.cont [11/16] 0.0, 128
        %2270 = vxpose.xlu0.b32.cont [12/16] 0.0, 128
        %2271 = vxpose.xlu0.b32.cont [13/16] 0.0, 128
        %2272 = vxpose.xlu0.b32.cont [14/16] 0.0, 128
        %2273 = vxpose.xlu0.b32.cont [15/16] 0.0, 128
        %2274 = vxpose.xlu0.b32.end [16/16] 0.0, 128
        %v2275 = vpop.trf.xlu0
        %v2276 = vpop.trf.xlu0
        %v2277 = vpop.trf.xlu0
        %v2278 = vpop.trf.xlu0
        %v2279 = vpop.trf.xlu0
        %v2280 = vpop.trf.xlu0
        %v2281 = vpop.trf.xlu0
        %v2282 = vpop.trf.xlu0
        %v2283 = vpop.trf.xlu0
        %v2284 = vpop.trf.xlu0
        %v2285 = vpop.trf.xlu0
        %v2286 = vpop.trf.xlu0
        %v2287 = vpop.trf.xlu0
        %v2288 = vpop.trf.xlu0
        %v2289 = vpop.trf.xlu0
        %v2290 = vpop.trf.xlu0
        %v2291 = vpack.c.bf16 %v2276, %v2275
        %v2292 = vpack.c.bf16 %v2278, %v2277
        %v2293 = vpack.c.bf16 %v2280, %v2279
        %v2294 = vpack.c.bf16 %v2282, %v2281
        %v2295 = vpack.c.bf16 %v1428, %v1425
        %v2296 = vpack.c.bf16 %v1460, %v1457
        %v2298 = vsel %vm1501, %v2291, 0
        %v2301 = vsel %vm1501, %v2292, 0
        %v2304 = vsel %vm1501, %v2293, 0
        %v2307 = vsel %vm1501, %v2294, 0
        %2309 = vmatprep.subr.bf16.mxu0 0
        %2310 = vmatpush1.bf16.msra.mxu0 %v2295
        %2311 = vmatprep.subr.bf16.mxu0 0
        %2312 = vmatpush1.bf16.msra.mxu0 0
        %2313 = vmatprep.subr.bf16.mxu0 0
        %2314 = vmatpush1.bf16.msra.mxu0 0
        %2315 = vmatprep.subr.bf16.mxu0 0
        %2316 = vmatpush1.bf16.msra.mxu0 0
        %2317 = vmatprep.subr.bf16.mxu0 0
        %2318 = vmatpush1.bf16.msra.mxu0 0
        %2319 = vmatprep.subr.bf16.mxu0 0
        %2320 = vmatpush1.bf16.msra.mxu0 0
        %2321 = vmatprep.subr.bf16.mxu0 0
        %2322 = vmatpush1.bf16.msra.mxu0 0
        %2323 = vmatprep.subr.bf16.mxu0 0
        %2324 = vmatpush1.bf16.msra.mxu0 0
        %2325 = vmatprep.subr.bf16.mxu0 0
        %2326 = vmatpush1.bf16.msra.mxu0 0
        %2327 = vmatprep.subr.bf16.mxu0 0
        %2328 = vmatpush1.bf16.msra.mxu0 0
        %2329 = vmatprep.subr.bf16.mxu0 0
        %2330 = vmatpush1.bf16.msra.mxu0 0
        %2331 = vmatprep.subr.bf16.mxu0 0
        %2332 = vmatpush1.bf16.msra.mxu0 0
        %2333 = vmatprep.subr.bf16.mxu0 0
        %2334 = vmatpush1.bf16.msra.mxu0 0
        %2335 = vmatprep.subr.bf16.mxu0 0
        %2336 = vmatpush1.bf16.msra.mxu0 0
        %2337 = vmatprep.subr.bf16.mxu0 0
        %2338 = vmatpush1.bf16.msra.mxu0 0
        %2339 = vmatprep.subr.bf16.mxu0 0
        %2340 = vmatpush1.bf16.msra.mxu0 0
        %2341 = vmatprep.mubr.bf16.mxu0 0
        %2342 = vmatmul.mubr.bf16.gmra.mrb[0].mxu0 %v2298
        %v2343 = vpop.f32.mrb[0].mxu0
        %v2344 = vadd.f32 0.0, %v2343
        %v2345 = vpop.f32.mrb[0].mxu0
        %v2346 = vpop.f32.mrb[0].mxu0
        %v2347 = vadd.f32 0.0, %v2346
        %v2348 = vpop.f32.mrb[0].mxu0
        %2349 = vmatprep.mubr.bf16.mxu0 0
        %2350 = vmatmul.mubr.bf16.gmra.mrb[0].mxu0 %v2301
        %v2351 = vpop.f32.mrb[0].mxu0
        %v2352 = vadd.f32 0.0, %v2351
        %v2353 = vpop.f32.mrb[0].mxu0
        %v2354 = vpop.f32.mrb[0].mxu0
        %v2355 = vadd.f32 0.0, %v2354
        %v2356 = vpop.f32.mrb[0].mxu0
        %2357 = vmatprep.mubr.bf16.mxu0 0
        %2358 = vmatmul.mubr.bf16.gmra.mrb[0].mxu0 %v2304
        %v2359 = vpop.f32.mrb[0].mxu0
        %v2360 = vadd.f32 0.0, %v2359
        %v2361 = vpop.f32.mrb[0].mxu0
        %v2362 = vpop.f32.mrb[0].mxu0
        %v2363 = vadd.f32 0.0, %v2362
        %v2364 = vpop.f32.mrb[0].mxu0
        %2365 = vmatprep.mubr.bf16.mxu0 0
        %2366 = vmatmul.mubr.bf16.gmra.mrb[0].mxu0 %v2307
        %v2367 = vpop.f32.mrb[0].mxu0
        %v2368 = vadd.f32 0.0, %v2367
        %v2369 = vpop.f32.mrb[0].mxu0
        %v2370 = vpop.f32.mrb[0].mxu0
        %v2371 = vadd.f32 0.0, %v2370
        %v2372 = vpop.f32.mrb[0].mxu0
        %2373 = vdwg.mxu0
        %v2374 = vsel %vm340, %v2344, -inf
        %2375 = vmax.xlane.f32.xlu0 %v2374
        %v2376 = vpop.xlane.xlu0 %2375
        %v2377 = vsel %vm340, %v2347, -inf
        %2378 = vmax.xlane.f32.xlu0 %v2377
        %v2379 = vpop.xlane.xlu0 %2378
        %v2380 = vsel %vm340, %v2352, -inf
        %2381 = vmax.xlane.f32.xlu0 %v2380
        %v2382 = vpop.xlane.xlu0 %2381
        %v2383 = vsel %vm340, %v2355, -inf
        %2384 = vmax.xlane.f32.xlu0 %v2383
        %v2385 = vpop.xlane.xlu0 %2384
        %v2386 = vsel %vm340, %v2360, -inf
        %2387 = vmax.xlane.f32.xlu0 %v2386
        %v2388 = vpop.xlane.xlu0 %2387
        %v2389 = vsel %vm340, %v2363, -inf
        %2390 = vmax.xlane.f32.xlu0 %v2389
        %v2391 = vpop.xlane.xlu0 %2390
        %v2392 = vsel %vm340, %v2368, -inf
        %2393 = vmax.xlane.f32.xlu0 %v2392
        %v2394 = vpop.xlane.xlu0 %2393
        %v2395 = vsel %vm340, %v2371, -inf
        %2396 = vmax.xlane.f32.xlu0 %v2395
        %v2397 = vpop.xlane.xlu0 %2396
        %v2398 = vsub.f32 %v2344, %v2376
        %v2399 = vsub.f32 %v2347, %v2379
        %v2400 = vsub.f32 %v2352, %v2382
        %v2401 = vsub.f32 %v2355, %v2385
        %v2402 = vsub.f32 %v2360, %v2388
        %v2403 = vsub.f32 %v2363, %v2391
        %v2404 = vsub.f32 %v2368, %v2394
        %v2405 = vsub.f32 %v2371, %v2397
        %v2406 = vmul.f32 %v2398, 1.442695
        %v2407 = vpow.pop %v2406
        %v2408 = vmul.f32 %v2399, 1.442695
        %v2409 = vpow.pop %v2408
        %v2410 = vmul.f32 %v2400, 1.442695
        %v2411 = vpow.pop %v2410
        %v2412 = vmul.f32 %v2401, 1.442695
        %v2413 = vpow.pop %v2412
        %v2414 = vmul.f32 %v2402, 1.442695
        %v2415 = vpow.pop %v2414
        %v2416 = vmul.f32 %v2403, 1.442695
        %v2417 = vpow.pop %v2416
        %v2418 = vmul.f32 %v2404, 1.442695
        %v2419 = vpow.pop %v2418
        %v2420 = vmul.f32 %v2405, 1.442695
        %v2421 = vpow.pop %v2420
        %v2422 = vsel %vm340, %v2407, 0.0
        %2423 = vadd.xlane.f32.xlu0 %v2422
        %v2424 = vpop.xlane.xlu0 %2423
        %v2425 = vsel %vm340, %v2409, 0.0
        %2426 = vadd.xlane.f32.xlu0 %v2425
        %v2427 = vpop.xlane.xlu0 %2426
        %v2428 = vsel %vm340, %v2411, 0.0
        %2429 = vadd.xlane.f32.xlu0 %v2428
        %v2430 = vpop.xlane.xlu0 %2429
        %v2431 = vsel %vm340, %v2413, 0.0
        %2432 = vadd.xlane.f32.xlu0 %v2431
        %v2433 = vpop.xlane.xlu0 %2432
        %v2434 = vsel %vm340, %v2415, 0.0
        %2435 = vadd.xlane.f32.xlu0 %v2434
        %v2436 = vpop.xlane.xlu0 %2435
        %v2437 = vsel %vm340, %v2417, 0.0
        %2438 = vadd.xlane.f32.xlu0 %v2437
        %v2439 = vpop.xlane.xlu0 %2438
        %v2440 = vsel %vm340, %v2419, 0.0
        %2441 = vadd.xlane.f32.xlu0 %v2440
        %v2442 = vpop.xlane.xlu0 %2441
        %v2443 = vsel %vm340, %v2421, 0.0
        %2444 = vadd.xlane.f32.xlu0 %v2443
        %v2445 = vpop.xlane.xlu0 %2444
        %v2446 = vrcp.pop %v2424
        %v2447 = vrcp.pop %v2427
        %v2448 = vrcp.pop %v2430
        %v2449 = vrcp.pop %v2433
        %v2450 = vrcp.pop %v2436
        %v2451 = vrcp.pop %v2439
        %v2452 = vrcp.pop %v2442
        %v2453 = vrcp.pop %v2445
        %v2454 = vmul.f32 %v2407, %v2446
        %v2455 = vmul.f32 %v2409, %v2447
        %v2456 = vmul.f32 %v2411, %v2448
        %v2457 = vmul.f32 %v2413, %v2449
        %v2458 = vmul.f32 %v2415, %v2450
        %v2459 = vmul.f32 %v2417, %v2451
        %v2460 = vmul.f32 %v2419, %v2452
        %v2461 = vmul.f32 %v2421, %v2453
        %v2462 = vpack.c.bf16 %v2455, %v2454
        %v2463 = vpack.c.bf16 %v2457, %v2456
        %v2464 = vpack.c.bf16 %v2459, %v2458
        %v2465 = vpack.c.bf16 %v2461, %v2460
        %v2467 = vsel %vm340, %v2296, 0
        %v2470 = vsel %vm340, %v2462, 0
        %v2473 = vsel %vm340, %v2463, 0
        %v2476 = vsel %vm340, %v2464, 0
        %v2479 = vsel %vm340, %v2465, 0
        %2481 = vmatprep.subr.bf16.mxu0 0
        %2482 = vmatpush1.bf16.xpose.msra.mxu0 %v2470
        %2483 = vmatprep.subr.bf16.mxu0 0
        %2484 = vmatpush1.bf16.xpose.msra.mxu0 %v2473
        %2485 = vmatprep.subr.bf16.mxu0 0
        %2486 = vmatpush1.bf16.xpose.msra.mxu0 %v2476
        %2487 = vmatprep.subr.bf16.mxu0 0
        %2488 = vmatpush1.bf16.xpose.msra.mxu0 %v2479
        %2489 = vmatprep.subr.bf16.mxu0 0
        %2490 = vmatpush1.bf16.xpose.msra.mxu0 0
        %2491 = vmatprep.subr.bf16.mxu0 0
        %2492 = vmatpush1.bf16.xpose.msra.mxu0 0
        %2493 = vmatprep.subr.bf16.mxu0 0
        %2494 = vmatpush1.bf16.xpose.msra.mxu0 0
        %2495 = vmatprep.subr.bf16.mxu0 0
        %2496 = vmatpush1.bf16.xpose.msra.mxu0 0
        %2497 = vmatprep.subr.bf16.mxu0 0
        %2498 = vmatpush1.bf16.xpose.msra.mxu0 0
        %2499 = vmatprep.subr.bf16.mxu0 0
        %2500 = vmatpush1.bf16.xpose.msra.mxu0 0
        %2501 = vmatprep.subr.bf16.mxu0 0
        %2502 = vmatpush1.bf16.xpose.msra.mxu0 0
        %2503 = vmatprep.subr.bf16.mxu0 0
        %2504 = vmatpush1.bf16.xpose.msra.mxu0 0
        %2505 = vmatprep.subr.bf16.mxu0 0
        %2506 = vmatpush1.bf16.xpose.msra.mxu0 0
        %2507 = vmatprep.subr.bf16.mxu0 0
        %2508 = vmatpush1.bf16.xpose.msra.mxu0 0
        %2509 = vmatprep.subr.bf16.mxu0 0
        %2510 = vmatpush1.bf16.xpose.msra.mxu0 0
        %2511 = vmatprep.subr.bf16.mxu0 0
        %2512 = vmatpush1.bf16.xpose.msra.mxu0 0
        %2513 = vmatprep.mubr.bf16.mxu0 0
        %2514 = vmatmul.mubr.bf16.gmra.mrb[0].mxu0 %v2467
        %v2515 = vpop.f32.mrb[0].mxu0
        %v2516 = vadd.f32 0.0, %v2515
        %v2517 = vpop.f32.mrb[0].mxu0
        %v2518 = vpop.f32.mrb[0].mxu0
        %v2519 = vadd.f32 0.0, %v2518
        %v2520 = vpop.f32.mrb[0].mxu0
        %2521 = vdwg.mxu0
        %2522 = vst.msk [vmem:[#allocation2 + $0x30] sm:$0xff] %vm340, %v2516
        %2523 = vst.msk [vmem:[#allocation2 + $0x38] sm:$0xff] %vm340, %v2519
        %v2524 = vld [vmem:[%s7] sm:$0xf]
        %v2525 = vld [vmem:[%s7 + $0x4] sm:$0xf]
        %v2526 = vld [vmem:[%s7 + $0x8] sm:$0xf]
        %v2527 = vld [vmem:[%s7 + $0xc] sm:$0xf]
        %v2528 = vld [vmem:[%s7 + $0x10] sm:$0xf]
        %v2529 = vld [vmem:[%s7 + $0x14] sm:$0xf]
        %v2530 = vld [vmem:[%s7 + $0x18] sm:$0xf]
        %v2531 = vld [vmem:[%s7 + $0x1c] sm:$0xf]
        %v2532 = vld [vmem:[#allocation2] sm:$0xff]
        %v2533 = vld [vmem:[#allocation2 + $0x8] sm:$0xff]
        %v2534 = vld [vmem:[#allocation2 + $0x10] sm:$0xff]
        %v2535 = vld [vmem:[#allocation2 + $0x18] sm:$0xff]
        %v2536 = vld [vmem:[#allocation2 + $0x20] sm:$0xff]
        %v2537 = vld [vmem:[#allocation2 + $0x28] sm:$0xff]
        %v2538 = vld [vmem:[#allocation2 + $0x30] sm:$0xff]
        %v2539 = vld [vmem:[#allocation2 + $0x38] sm:$0xff]
        %v2540 = vpack.c.bf16 %v2533, %v2532
        %v2541 = vpack.c.bf16 %v2535, %v2534
        %v2542 = vpack.c.bf16 %v2537, %v2536
        %v2543 = vpack.c.bf16 %v2539, %v2538
        %v2544 = vld [vmem:[%s8] sm:$0xff]
        %v2545 = vld [vmem:[%s8 + $0x8] sm:$0xff]
        %v2546 = vld [vmem:[%s8 + $0x10] sm:$0xff]
        %v2547 = vld [vmem:[%s8 + $0x18] sm:$0xff]
        %v2548 = vld [vmem:[%s8 + $0x20] sm:$0xff]
        %v2549 = vld [vmem:[%s8 + $0x28] sm:$0xff]
        %v2550 = vld [vmem:[%s8 + $0x30] sm:$0xff]
        %v2551 = vld [vmem:[%s8 + $0x38] sm:$0xff]
        %2553 = vset.pattern.permute.xlu0 0
        %2554 = vperm.xlu0 %2553, %v2544
        %v2555 = vpop.permute.xlu0 %2554
        %2558 = vset.pattern.permute.xlu0 0
        %2559 = vperm.xlu0 %2558, %v2545
        %v2560 = vpop.permute.xlu0 %2559
        %2563 = vset.pattern.permute.xlu0 0
        %2564 = vperm.xlu0 %2563, %v2546
        %v2565 = vpop.permute.xlu0 %2564
        %2568 = vset.pattern.permute.xlu0 0
        %2569 = vperm.xlu0 %2568, %v2547
        %v2570 = vpop.permute.xlu0 %2569
        %2573 = vset.pattern.permute.xlu0 0
        %2574 = vperm.xlu0 %2573, %v2548
        %v2575 = vpop.permute.xlu0 %2574
        %2578 = vset.pattern.permute.xlu0 0
        %2579 = vperm.xlu0 %2578, %v2549
        %v2580 = vpop.permute.xlu0 %2579
        %2583 = vset.pattern.permute.xlu0 0
        %2584 = vperm.xlu0 %2583, %v2550
        %v2585 = vpop.permute.xlu0 %2584
        %2588 = vset.pattern.permute.xlu0 0
        %2589 = vperm.xlu0 %2588, %v2551
        %v2590 = vpop.permute.xlu0 %2589
        %v2600 = vunpack.c.l.b16 %v2524
        %v2601 = vunpack.c.l.b16 %v2525
        %v2602 = vunpack.c.l.b16 %v2526
        %v2603 = vunpack.c.l.b16 %v2527
        %v2604 = vunpack.c.l.b16 %v2528
        %v2605 = vunpack.c.l.b16 %v2529
        %v2606 = vunpack.c.l.b16 %v2530
        %v2607 = vunpack.c.l.b16 %v2531
        %v2608 = vpack.c.b16 %v2601, %v2600
        %v2609 = vpack.c.b16 %v2603, %v2602
        %v2610 = vpack.c.b16 %v2605, %v2604
        %v2611 = vpack.c.b16 %v2607, %v2606
        %v2613 = vsel %vm340, %v2608, 0
        %v2616 = vsel %vm340, %v2609, 0
        %v2619 = vsel %vm340, %v2610, 0
        %v2622 = vsel %vm340, %v2611, 0
        %2624 = vmatprep.subr.bf16.mxu0 0
        %2625 = vmatpush1.bf16.msra.mxu0 %v2540
        %2626 = vmatprep.subr.bf16.mxu0 0
        %2627 = vmatpush1.bf16.msra.mxu0 %v2541
        %2628 = vmatprep.subr.bf16.mxu0 0
        %2629 = vmatpush1.bf16.msra.mxu0 %v2542
        %2630 = vmatprep.subr.bf16.mxu0 0
        %2631 = vmatpush1.bf16.msra.mxu0 %v2543
        %2632 = vmatprep.subr.bf16.mxu0 0
        %2633 = vmatpush1.bf16.msra.mxu0 0
        %2634 = vmatprep.subr.bf16.mxu0 0
        %2635 = vmatpush1.bf16.msra.mxu0 0
        %2636 = vmatprep.subr.bf16.mxu0 0
        %2637 = vmatpush1.bf16.msra.mxu0 0
        %2638 = vmatprep.subr.bf16.mxu0 0
        %2639 = vmatpush1.bf16.msra.mxu0 0
        %2640 = vmatprep.subr.bf16.mxu0 0
        %2641 = vmatpush1.bf16.msra.mxu0 0
        %2642 = vmatprep.subr.bf16.mxu0 0
        %2643 = vmatpush1.bf16.msra.mxu0 0
        %2644 = vmatprep.subr.bf16.mxu0 0
        %2645 = vmatpush1.bf16.msra.mxu0 0
        %2646 = vmatprep.subr.bf16.mxu0 0
        %2647 = vmatpush1.bf16.msra.mxu0 0
        %2648 = vmatprep.subr.bf16.mxu0 0
        %2649 = vmatpush1.bf16.msra.mxu0 0
        %2650 = vmatprep.subr.bf16.mxu0 0
        %2651 = vmatpush1.bf16.msra.mxu0 0
        %2652 = vmatprep.subr.bf16.mxu0 0
        %2653 = vmatpush1.bf16.msra.mxu0 0
        %2654 = vmatprep.subr.bf16.mxu0 0
        %2655 = vmatpush1.bf16.msra.mxu0 0
        %2656 = vmatprep.mubr.bf16.mxu0 0
        %2657 = vmatmul.mubr.bf16.gmra.mrb[0].mxu0 %v2613
        %v2658 = vpop.f32.mrb[0].mxu0
        %v2659 = vadd.f32 %v2555, %v2658
        %v2660 = vpop.f32.mrb[0].mxu0
        %v2661 = vpop.f32.mrb[0].mxu0
        %v2662 = vadd.f32 %v2560, %v2661
        %v2663 = vpop.f32.mrb[0].mxu0
        %2664 = vmatprep.mubr.bf16.mxu0 0
        %2665 = vmatmul.mubr.bf16.gmra.mrb[0].mxu0 %v2616
        %v2666 = vpop.f32.mrb[0].mxu0
        %v2667 = vadd.f32 %v2565, %v2666
        %v2668 = vpop.f32.mrb[0].mxu0
        %v2669 = vpop.f32.mrb[0].mxu0
        %v2670 = vadd.f32 %v2570, %v2669
        %v2671 = vpop.f32.mrb[0].mxu0
        %2672 = vmatprep.mubr.bf16.mxu0 0
        %2673 = vmatmul.mubr.bf16.gmra.mrb[0].mxu0 %v2619
        %v2674 = vpop.f32.mrb[0].mxu0
        %v2675 = vadd.f32 %v2575, %v2674
        %v2676 = vpop.f32.mrb[0].mxu0
        %v2677 = vpop.f32.mrb[0].mxu0
        %v2678 = vadd.f32 %v2580, %v2677
        %v2679 = vpop.f32.mrb[0].mxu0
        %2680 = vmatprep.mubr.bf16.mxu0 0
        %2681 = vmatmul.mubr.bf16.gmra.mrb[0].mxu0 %v2622
        %v2682 = vpop.f32.mrb[0].mxu0
        %v2683 = vadd.f32 %v2585, %v2682
        %v2684 = vpop.f32.mrb[0].mxu0
        %v2685 = vpop.f32.mrb[0].mxu0
        %v2686 = vadd.f32 %v2590, %v2685
        %v2687 = vpop.f32.mrb[0].mxu0
        %2688 = vdwg.mxu0
        %v2689 = vadd.f32 %v332, %v2659
        %v2690 = vadd.f32 %v333, %v2662
        %v2691 = vadd.f32 %v334, %v2667
        %v2692 = vadd.f32 %v335, %v2670
        %v2693 = vadd.f32 %v336, %v2675
        %v2694 = vadd.f32 %v337, %v2678
        %v2695 = vadd.f32 %v338, %v2683
        %v2696 = vadd.f32 %v339, %v2686
        %2697 = vst.msk [vmem:[%s325] sm:$0xff] %vm340, %v2689
        %2698 = vst.msk [vmem:[%s325 + $0x8] sm:$0xff] %vm340, %v2690
        %2699 = vst.msk [vmem:[%s325 + $0x10] sm:$0xff] %vm340, %v2691
        %2700 = vst.msk [vmem:[%s325 + $0x18] sm:$0xff] %vm340, %v2692
        %2701 = vst.msk [vmem:[%s325 + $0x20] sm:$0xff] %vm340, %v2693
        %2702 = vst.msk [vmem:[%s325 + $0x28] sm:$0xff] %vm340, %v2694
        %2703 = vst.msk [vmem:[%s325 + $0x30] sm:$0xff] %vm340, %v2695
        %2704 = vst.msk [vmem:[%s325 + $0x38] sm:$0xff] %vm340, %v2696
        %s2705 = sand.u32 %s225, 1
        %s2706 = scalar_lea.sflag [#allocation4], %s2705
        %s2707 = sand.u32 %s225, 1
        %s2708 = smul.addr %s2707, 64
        %s2709 = scalar_lea.vmem [#allocation3], %s2708
        // Predicated region
        $region57: #{tpu_custom_call.1} parent=55 // pred_check
          %p2710 = pneg %p235
        $region58: #{tpu_custom_call.1} parent=55 // pred_check_branch
          %2712 = sbr.rel (%p2710) target = $region60
        $region59: #{tpu_custom_call.1} parent=55 // pred_region
          %s2714 = ssub.s32 1024, 1024
          %2715 = vsyncadd %s2706, %s2714
          %s2716 = smul.addr %s23, 8
          %s2717 = smul.addr %s2716, 128
          %s2718 = scalar_lea.hbm %s9, %s2717
          %s2719 = sshll.u32 %s2709, 4
          %s2720 = int_to_ptr.vmem [resolvable:$true] %s2719
          %2725 = dma.vmem_to_hbm [thread:$0]  %s2720, 1024, %s2718, %s2706, 128, 128, 8
        $region60: #{tpu_custom_call.1} parent=55 // pred_fallthru
          _
      $region56: #{tpu_custom_call.1} parent=5 // pred_fallthru
        _
      %p2726 = scmp.le.s32.totalorder 2, %s18
      // Predicated region
      $region61: #{tpu_custom_call.1} parent=5 // pred_check
        %p2727 = pneg %p2726
      $region62: #{tpu_custom_call.1} parent=5 // pred_check_branch
        %2729 = sbr.rel (%p2727) target = $region64
      $region63: #{tpu_custom_call.1} parent=5 // pred_region
        %s2730 = ssub.s32 %s18, 2
        // Predicated region
        $region65: #{tpu_custom_call.1} parent=63 // pred_check
          %p2731 = pneg %p241
        $region66: #{tpu_custom_call.1} parent=63 // pred_check_branch
          %2733 = sbr.rel (%p2731) target = $region68
        $region67: #{tpu_custom_call.1} parent=63 // pred_region
          %s2734 = sand.u32 %s226, 1
          %s2735 = scalar_lea.sflag [#allocation4], %s2734
          %s2736 = sand.u32 %s226, 1
          %s2737 = smul.addr %s2736, 64
          %s2738 = scalar_lea.vmem [#allocation3], %s2737
          %2739 = dma.done %s2735, 1024
        $region68: #{tpu_custom_call.1} parent=63 // pred_fallthru
          _
      $region64: #{tpu_custom_call.1} parent=5 // pred_fallthru
        _
    $region6: #{tpu_custom_call.1} parent=1 // loop_footer
      %s22 = sadd.s32 1, %s18
    $region7: #{tpu_custom_call.1} parent=1 // loop_footer_branch
      %17 = sbr.rel target = $region3
    $region8: #{tpu_custom_call.1} parent=1 // loop_exit
      _
    %2740 = vsyncpa [#allocation4], 1
    %s2741 = scalar_lea.sflag [#allocation4], 1
    %2742 = vsyncpa %s2741, 1

</llo_original>
